<compile_context>
chip_gen: v6e
topology: v6e:2x2x1
jax: 0.10.0
libtpu: 0.0.40
codegen_flags: <defaults>
</compile_context>

<pallas_src>
import numpy as np

import jax
import jax.numpy as jnp
from jax.experimental import pallas as pl
from jax.experimental.pallas import tpu as pltpu


_VMEM_LIMIT = 48 * 1024 * 1024  # <= 56 MiB so the scoped limit is valid on v7x too.


def _bilinear_matrix_1d(in_size, out_size):
    """1-D interpolation matrix matching F.interpolate(bilinear, align_corners=True)."""
    if out_size == 1:
        a = np.zeros((1, in_size), np.float32)
        a[0, 0] = 1.0
        return a
    src = np.arange(out_size, dtype=np.float64) * (in_size - 1) / (out_size - 1)
    i0 = np.clip(np.floor(src).astype(np.int64), 0, in_size - 1)
    i1 = np.minimum(i0 + 1, in_size - 1)
    w1 = (src - i0).astype(np.float32)
    w0 = 1.0 - w1
    a = np.zeros((out_size, in_size), np.float32)
    a[np.arange(out_size), i0] += w0
    a[np.arange(out_size), i1] += w1
    return a


# ---------------------------------------------------------------------------
# Fused kernel: for one batch element, run every branch's conv (one big-K MXU
# matmul), bilinear upsample (one MXU matmul) and the residual accumulation.
# ---------------------------------------------------------------------------
def _make_fused_kernel(branch_meta, oh, ow, cout):
    """branch_meta: tuple of (h, w, cin, sf) per branch.

    Kernel ref order: for each branch: x_pad_ref (1,h+2,w+2,cin) bf16,
                                       w_ref (9*cin,cout) bf16,
                                       [m_ref (oh*ow,h*w) bf16 if sf != 1];
    last ref: o_ref (1,oh,ow,cout) f32.
    """

    def kernel(*refs):
        idx = 0
        acc = None
        for (h, w, cin, sf) in branch_meta:
            x_ref = refs[idx]; idx += 1
            wt_ref = refs[idx]; idx += 1
            m_ref = None
            if sf != 1:
                m_ref = refs[idx]; idx += 1

            x = x_ref[0]                                   # (h+2, w+2, cin) bf16
            # Hoist the width shift: 3 width-compacted buffers, then contiguous
            # (free) row slices for the 3 ky taps -> 3 relayouts instead of 9.
            xc = [x[:, kx:kx + w, :] for kx in range(3)]
            taps = []
            for ky in range(3):
                for kx in range(3):
                    taps.append(xc[kx][ky:ky + h].reshape(h * w, cin))
            # im2col slab in VMEM: one (h*w, 9*cin) @ (9*cin, cout) MXU matmul.
            col = jnp.concatenate(taps, axis=-1)           # (h*w, 9*cin) bf16
            y = jnp.dot(col, wt_ref[...],
                        preferred_element_type=jnp.float32)  # (h*w, cout) f32

            if sf != 1:
                # Bilinear align_corners=True upsample as one bf16 MXU matmul.
                y = jnp.dot(m_ref[...], y.astype(jnp.bfloat16),
                            preferred_element_type=jnp.float32)  # (oh*ow, cout)

            acc = y if acc is None else acc + y

        o_ref = refs[-1]
        o_ref[0] = acc.reshape(oh, ow, cout).astype(o_ref.dtype)

    return kernel


# ---------------------------------------------------------------------------
# Module
# ---------------------------------------------------------------------------
class MultiResolutionFusion:
    """JAX/Pallas port of the PyTorch MultiResolutionFusion module (NCHW I/O)."""

    def __init__(self, out_feature, *shapes, key):
        _, max_h, _ = max(shapes, key=lambda s: s[1])
        self.out_feature = out_feature
        self.shapes = tuple(shapes)
        self.scale_factors = []
        self.weights = []                       # torch-layout f32 (for reference math)
        keys = jax.random.split(key, len(shapes))
        for i, (feat, h, w) in enumerate(shapes):
            if max_h % h != 0:
                raise ValueError("max_size not divisble by shape {}".format(i))
            self.scale_factors.append(max_h // h)
            bound = 1.0 / np.sqrt(feat * 3 * 3)  # torch Conv2d default init
            wi = jax.random.uniform(keys[i], (out_feature, feat, 3, 3),
                                    jnp.float32, minval=-bound, maxval=bound)
            self.weights.append(wi)

        # Output spatial size (all branches must agree, as in the torch module).
        self.oh = self.shapes[0][1] * self.scale_factors[0]
        self.ow = self.shapes[0][2] * self.scale_factors[0]

        # Trace-time constants for the kernel: bf16 (9*Cin, Cout) weights and bf16
        # kron(A_h, A_w) bilinear interpolation matrices.
        self._w_flat = []
        self._interp = []
        for i, (feat, h, w) in enumerate(self.shapes):
            sf = self.scale_factors[i]
            if h * sf != self.oh or w * sf != self.ow:
                raise ValueError("branch {} does not upsample to the common size".format(i))
            wk = jnp.transpose(self.weights[i], (2, 3, 1, 0))       # (3,3,Cin,Cout)
            self._w_flat.append(wk.reshape(9 * feat, out_feature).astype(jnp.bfloat16))
            if sf != 1:
                m = np.kron(_bilinear_matrix_1d(h, self.oh),
                            _bilinear_matrix_1d(w, self.ow))        # (oh*ow, h*w)
                self._interp.append(jnp.asarray(m, dtype=jnp.bfloat16))
            else:
                self._interp.append(None)

    def __call__(self, *xs_nchw):
        n = xs_nchw[0].shape[0]
        cout, oh, ow = self.out_feature, self.oh, self.ow

        kernel_args = []
        in_specs = []
        branch_meta = []
        for i, x in enumerate(xs_nchw):
            feat, h, w = self.shapes[i]
            sf = self.scale_factors[i]
            # NCHW -> NHWC, zero-pad the halo, cast to bf16 (tiny pre-pass fused by
            # XLA; the kernel itself never writes intermediates back to HBM).
            xp = jnp.pad(jnp.transpose(x, (0, 2, 3, 1)),
                         ((0, 0), (1, 1), (1, 1), (0, 0))).astype(jnp.bfloat16)
            kernel_args.append(xp)
            in_specs.append(pl.BlockSpec((1, h + 2, w + 2, feat),
                                         lambda b: (b, 0, 0, 0)))
            kernel_args.append(self._w_flat[i])
            in_specs.append(pl.BlockSpec((9 * feat, cout), lambda b: (0, 0)))
            if sf != 1:
                m = self._interp[i]
                kernel_args.append(m)
                in_specs.append(pl.BlockSpec(m.shape, lambda b: (0, 0)))
            branch_meta.append((h, w, feat, sf))

        out_nhwc = pl.pallas_call(
            _make_fused_kernel(tuple(branch_meta), oh, ow, cout),
            out_shape=jax.ShapeDtypeStruct((n, oh, ow, cout), jnp.float32),
            grid=(n,),
            in_specs=in_specs,
            out_specs=pl.BlockSpec((1, oh, ow, cout), lambda b: (b, 0, 0, 0)),
            compiler_params=pltpu.CompilerParams(
                dimension_semantics=("parallel",),
                vmem_limit_bytes=_VMEM_LIMIT),
        )(*kernel_args)

        return jnp.transpose(out_nhwc, (0, 3, 1, 2))               # NHWC -> NCHW


# ---------------------------------------------------------------------------
# Pure-JAX reference (XLA ops, f32) for a numerical sanity check
# ---------------------------------------------------------------------------
def _reference_forward(fusion, *xs_nchw):
    out = None
    for i, x in enumerate(xs_nchw):
        y = jax.lax.conv_general_dilated(
            x, fusion.weights[i], window_strides=(1, 1),
            padding=((1, 1), (1, 1)),
            dimension_numbers=("NCHW", "OIHW", "NCHW"))
        sf = fusion.scale_factors[i]
        if sf != 1:
            _, _, h, wd = y.shape
            ah = jnp.asarray(_bilinear_matrix_1d(h, h * sf))
            aw = jnp.asarray(_bilinear_matrix_1d(wd, wd * sf))
            y = jnp.einsum("ph,qw,nchw->ncpq", ah, aw, y)
        out = y if out is None else out + y
    return out


if __name__ == "__main__":
    key = jax.random.PRNGKey(0)
    kp, k0, k1 = jax.random.split(key, 3)

    out_feature = 128                         # lane-dense channel count
    shapes = ((32, 16, 16), (64, 8, 8))       # (feat, h, w) per input branch
    fusion = MultiResolutionFusion(out_feature, *shapes, key=kp)

    x0 = jax.random.normal(k0, (2, 32, 16, 16), jnp.float32)   # NCHW, sf=1
    x1 = jax.random.normal(k1, (2, 64, 8, 8), jnp.float32)     # NCHW, sf=2

    fwd = jax.jit(lambda a, b: fusion(a, b))
    y = jax.block_until_ready(fwd(x0, x1))

    assert y.shape == (2, out_feature, 16, 16), y.shape
    assert bool(jnp.all(jnp.isfinite(y)))

    # Numerical check vs. pure-JAX f32 reference (bf16 MXU inputs -> loose tolerance).
    y_ref = jax.block_until_ready(
        jax.jit(lambda a, b: _reference_forward(fusion, a, b))(x0, x1))
    np.testing.assert_allclose(np.asarray(y), np.asarray(y_ref), rtol=5e-2, atol=5e-2)

    print("KERNEL_OK")
</pallas_src>

<mosaic_0001>
module attributes {stable_mosaic.version = 11 : i64} {
  func.func @kernel(%arg0: i32, %arg1: memref<1x18x18x32xbf16, #tpu.memory_space<vmem>>, %arg2: memref<288x128xbf16, #tpu.memory_space<vmem>>, %arg3: memref<1x10x10x64xbf16, #tpu.memory_space<vmem>>, %arg4: memref<576x128xbf16, #tpu.memory_space<vmem>>, %arg5: memref<256x64xbf16, #tpu.memory_space<vmem>>, %arg6: memref<1x16x16x128xf32, #tpu.memory_space<vmem>>) attributes {dimension_semantics = [#tpu.dimension_semantics<parallel>], iteration_bounds = array<i64: 2>, scalar_prefetch = 0 : i64, scratch_operands = 0 : i64, tpu.core_type = #tpu.core_type<tc>, window_params = [{transform_indices = @transform_0, window_bounds = array<i64: 1, 18, 18, 32>}, {pipeline_mode = #tpu.pipeline_mode<synchronous>, transform_indices = @transform_1, window_bounds = array<i64: 288, 128>}, {transform_indices = @transform_2, window_bounds = array<i64: 1, 10, 10, 64>}, {pipeline_mode = #tpu.pipeline_mode<synchronous>, transform_indices = @transform_3, window_bounds = array<i64: 576, 128>}, {pipeline_mode = #tpu.pipeline_mode<synchronous>, transform_indices = @transform_4, window_bounds = array<i64: 256, 64>}, {transform_indices = @transform_5, window_bounds = array<i64: 1, 16, 16, 128>}]} {
    %c0 = arith.constant 0 : index
    %c0_0 = arith.constant 0 : index
    %c0_1 = arith.constant 0 : index
    %c0_2 = arith.constant 0 : index
    %0 = vector.load %arg1[%c0, %c0_0, %c0_1, %c0_2] : memref<1x18x18x32xbf16, #tpu.memory_space<vmem>>, vector<1x18x18x32xbf16>
    %1 = vector.shape_cast %0 : vector<1x18x18x32xbf16> to vector<18x18x32xbf16>
    %2 = vector.extract_strided_slice %1 {offsets = [0, 0, 0], sizes = [18, 16, 32], strides = [1, 1, 1]} : vector<18x18x32xbf16> to vector<18x16x32xbf16>
    %3 = vector.extract_strided_slice %1 {offsets = [0, 1, 0], sizes = [18, 16, 32], strides = [1, 1, 1]} : vector<18x18x32xbf16> to vector<18x16x32xbf16>
    %4 = vector.extract_strided_slice %1 {offsets = [0, 2, 0], sizes = [18, 16, 32], strides = [1, 1, 1]} : vector<18x18x32xbf16> to vector<18x16x32xbf16>
    %5 = vector.extract_strided_slice %2 {offsets = [0, 0, 0], sizes = [16, 16, 32], strides = [1, 1, 1]} : vector<18x16x32xbf16> to vector<16x16x32xbf16>
    %6 = vector.shape_cast %5 : vector<16x16x32xbf16> to vector<256x32xbf16>
    %7 = vector.extract_strided_slice %3 {offsets = [0, 0, 0], sizes = [16, 16, 32], strides = [1, 1, 1]} : vector<18x16x32xbf16> to vector<16x16x32xbf16>
    %8 = vector.shape_cast %7 : vector<16x16x32xbf16> to vector<256x32xbf16>
    %9 = vector.extract_strided_slice %4 {offsets = [0, 0, 0], sizes = [16, 16, 32], strides = [1, 1, 1]} : vector<18x16x32xbf16> to vector<16x16x32xbf16>
    %10 = vector.shape_cast %9 : vector<16x16x32xbf16> to vector<256x32xbf16>
    %11 = vector.extract_strided_slice %2 {offsets = [1, 0, 0], sizes = [16, 16, 32], strides = [1, 1, 1]} : vector<18x16x32xbf16> to vector<16x16x32xbf16>
    %12 = vector.shape_cast %11 : vector<16x16x32xbf16> to vector<256x32xbf16>
    %13 = vector.extract_strided_slice %3 {offsets = [1, 0, 0], sizes = [16, 16, 32], strides = [1, 1, 1]} : vector<18x16x32xbf16> to vector<16x16x32xbf16>
    %14 = vector.shape_cast %13 : vector<16x16x32xbf16> to vector<256x32xbf16>
    %15 = vector.extract_strided_slice %4 {offsets = [1, 0, 0], sizes = [16, 16, 32], strides = [1, 1, 1]} : vector<18x16x32xbf16> to vector<16x16x32xbf16>
    %16 = vector.shape_cast %15 : vector<16x16x32xbf16> to vector<256x32xbf16>
    %17 = vector.extract_strided_slice %2 {offsets = [2, 0, 0], sizes = [16, 16, 32], strides = [1, 1, 1]} : vector<18x16x32xbf16> to vector<16x16x32xbf16>
    %18 = vector.shape_cast %17 : vector<16x16x32xbf16> to vector<256x32xbf16>
    %19 = vector.extract_strided_slice %3 {offsets = [2, 0, 0], sizes = [16, 16, 32], strides = [1, 1, 1]} : vector<18x16x32xbf16> to vector<16x16x32xbf16>
    %20 = vector.shape_cast %19 : vector<16x16x32xbf16> to vector<256x32xbf16>
    %21 = vector.extract_strided_slice %4 {offsets = [2, 0, 0], sizes = [16, 16, 32], strides = [1, 1, 1]} : vector<18x16x32xbf16> to vector<16x16x32xbf16>
    %22 = vector.shape_cast %21 : vector<16x16x32xbf16> to vector<256x32xbf16>
    %23 = tpu.concatenate %6, %8, %10, %12, %14, %16, %18, %20, %22 in 1 : vector<256x32xbf16>, vector<256x32xbf16>, vector<256x32xbf16>, vector<256x32xbf16>, vector<256x32xbf16>, vector<256x32xbf16>, vector<256x32xbf16>, vector<256x32xbf16>, vector<256x32xbf16> -> vector<256x288xbf16>
    %c0_3 = arith.constant 0 : index
    %c0_4 = arith.constant 0 : index
    %24 = vector.load %arg2[%c0_3, %c0_4] : memref<288x128xbf16, #tpu.memory_space<vmem>>, vector<288x128xbf16>
    %cst = arith.constant dense<0.000000e+00> : vector<256x128xf32>
    %25 = tpu.matmul %23, %24, %cst {dimension_numbers = #tpu.dot_dimension_numbers<[1], [0], [0], [1], [0, 0, 1, 1], [], []>} : vector<256x288xbf16>, vector<288x128xbf16>, vector<256x128xf32> -> vector<256x128xf32>
    %c0_5 = arith.constant 0 : index
    %c0_6 = arith.constant 0 : index
    %c0_7 = arith.constant 0 : index
    %c0_8 = arith.constant 0 : index
    %26 = vector.load %arg3[%c0_5, %c0_6, %c0_7, %c0_8] : memref<1x10x10x64xbf16, #tpu.memory_space<vmem>>, vector<1x10x10x64xbf16>
    %27 = vector.shape_cast %26 : vector<1x10x10x64xbf16> to vector<10x10x64xbf16>
    %28 = vector.extract_strided_slice %27 {offsets = [0, 0, 0], sizes = [10, 8, 64], strides = [1, 1, 1]} : vector<10x10x64xbf16> to vector<10x8x64xbf16>
    %29 = vector.extract_strided_slice %27 {offsets = [0, 1, 0], sizes = [10, 8, 64], strides = [1, 1, 1]} : vector<10x10x64xbf16> to vector<10x8x64xbf16>
    %30 = vector.extract_strided_slice %27 {offsets = [0, 2, 0], sizes = [10, 8, 64], strides = [1, 1, 1]} : vector<10x10x64xbf16> to vector<10x8x64xbf16>
    %31 = vector.extract_strided_slice %28 {offsets = [0, 0, 0], sizes = [8, 8, 64], strides = [1, 1, 1]} : vector<10x8x64xbf16> to vector<8x8x64xbf16>
    %32 = vector.shape_cast %31 : vector<8x8x64xbf16> to vector<64x64xbf16>
    %33 = vector.extract_strided_slice %29 {offsets = [0, 0, 0], sizes = [8, 8, 64], strides = [1, 1, 1]} : vector<10x8x64xbf16> to vector<8x8x64xbf16>
    %34 = vector.shape_cast %33 : vector<8x8x64xbf16> to vector<64x64xbf16>
    %35 = vector.extract_strided_slice %30 {offsets = [0, 0, 0], sizes = [8, 8, 64], strides = [1, 1, 1]} : vector<10x8x64xbf16> to vector<8x8x64xbf16>
    %36 = vector.shape_cast %35 : vector<8x8x64xbf16> to vector<64x64xbf16>
    %37 = vector.extract_strided_slice %28 {offsets = [1, 0, 0], sizes = [8, 8, 64], strides = [1, 1, 1]} : vector<10x8x64xbf16> to vector<8x8x64xbf16>
    %38 = vector.shape_cast %37 : vector<8x8x64xbf16> to vector<64x64xbf16>
    %39 = vector.extract_strided_slice %29 {offsets = [1, 0, 0], sizes = [8, 8, 64], strides = [1, 1, 1]} : vector<10x8x64xbf16> to vector<8x8x64xbf16>
    %40 = vector.shape_cast %39 : vector<8x8x64xbf16> to vector<64x64xbf16>
    %41 = vector.extract_strided_slice %30 {offsets = [1, 0, 0], sizes = [8, 8, 64], strides = [1, 1, 1]} : vector<10x8x64xbf16> to vector<8x8x64xbf16>
    %42 = vector.shape_cast %41 : vector<8x8x64xbf16> to vector<64x64xbf16>
    %43 = vector.extract_strided_slice %28 {offsets = [2, 0, 0], sizes = [8, 8, 64], strides = [1, 1, 1]} : vector<10x8x64xbf16> to vector<8x8x64xbf16>
    %44 = vector.shape_cast %43 : vector<8x8x64xbf16> to vector<64x64xbf16>
    %45 = vector.extract_strided_slice %29 {offsets = [2, 0, 0], sizes = [8, 8, 64], strides = [1, 1, 1]} : vector<10x8x64xbf16> to vector<8x8x64xbf16>
    %46 = vector.shape_cast %45 : vector<8x8x64xbf16> to vector<64x64xbf16>
    %47 = vector.extract_strided_slice %30 {offsets = [2, 0, 0], sizes = [8, 8, 64], strides = [1, 1, 1]} : vector<10x8x64xbf16> to vector<8x8x64xbf16>
    %48 = vector.shape_cast %47 : vector<8x8x64xbf16> to vector<64x64xbf16>
    %49 = tpu.concatenate %32, %34, %36, %38, %40, %42, %44, %46, %48 in 1 : vector<64x64xbf16>, vector<64x64xbf16>, vector<64x64xbf16>, vector<64x64xbf16>, vector<64x64xbf16>, vector<64x64xbf16>, vector<64x64xbf16>, vector<64x64xbf16>, vector<64x64xbf16> -> vector<64x576xbf16>
    %c0_9 = arith.constant 0 : index
    %c0_10 = arith.constant 0 : index
    %50 = vector.load %arg4[%c0_9, %c0_10] : memref<576x128xbf16, #tpu.memory_space<vmem>>, vector<576x128xbf16>
    %cst_11 = arith.constant dense<0.000000e+00> : vector<64x128xf32>
    %51 = tpu.matmul %49, %50, %cst_11 {dimension_numbers = #tpu.dot_dimension_numbers<[1], [0], [0], [1], [0, 0, 1, 1], [], []>} : vector<64x576xbf16>, vector<576x128xbf16>, vector<64x128xf32> -> vector<64x128xf32>
    %c0_12 = arith.constant 0 : index
    %c0_13 = arith.constant 0 : index
    %52 = vector.load %arg5[%c0_12, %c0_13] : memref<256x64xbf16, #tpu.memory_space<vmem>>, vector<256x64xbf16>
    %53 = arith.truncf %51 : vector<64x128xf32> to vector<64x128xbf16>
    %cst_14 = arith.constant dense<0.000000e+00> : vector<256x128xf32>
    %54 = tpu.matmul %52, %53, %cst_14 {dimension_numbers = #tpu.dot_dimension_numbers<[1], [0], [0], [1], [0, 0, 1, 1], [], []>} : vector<256x64xbf16>, vector<64x128xbf16>, vector<256x128xf32> -> vector<256x128xf32>
    %55 = arith.addf %25, %54 : vector<256x128xf32>
    %56 = vector.shape_cast %55 : vector<256x128xf32> to vector<16x16x128xf32>
    %c0_15 = arith.constant 0 : index
    %c0_16 = arith.constant 0 : index
    %c0_17 = arith.constant 0 : index
    %c0_18 = arith.constant 0 : index
    %57 = vector.load %arg6[%c0_15, %c0_16, %c0_17, %c0_18] : memref<1x16x16x128xf32, #tpu.memory_space<vmem>>, vector<1x16x16x128xf32>
    %58 = vector.shape_cast %57 : vector<1x16x16x128xf32> to vector<16x16x128xf32>
    %59 = vector.shape_cast %56 : vector<16x16x128xf32> to vector<1x16x16x128xf32>
    tpu.vector_store %arg6[%c0_15, %c0_16, %c0_17, %c0_18], %59 {strides = array<i32>} : memref<1x16x16x128xf32, #tpu.memory_space<vmem>>, vector<1x16x16x128xf32>,
    return
  }
  func.func @transform_0(%arg0: i32) -> (i32, i32, i32, i32) {
    %c0_i32 = arith.constant 0 : i32
    %c0_i32_0 = arith.constant 0 : i32
    %c0_i32_1 = arith.constant 0 : i32
    %c0_i32_2 = arith.constant 0 : i32
    return %arg0, %c0_i32, %c0_i32_0, %c0_i32_1 : i32, i32, i32, i32
  }
  func.func @transform_1(%arg0: i32) -> (i32, i32) {
    %c0_i32 = arith.constant 0 : i32
    %c0_i32_0 = arith.constant 0 : i32
    %c0_i32_1 = arith.constant 0 : i32
    return %c0_i32, %c0_i32_0 : i32, i32
  }
  func.func @transform_2(%arg0: i32) -> (i32, i32, i32, i32) {
    %c0_i32 = arith.constant 0 : i32
    %c0_i32_0 = arith.constant 0 : i32
    %c0_i32_1 = arith.constant 0 : i32
    %c0_i32_2 = arith.constant 0 : i32
    return %arg0, %c0_i32, %c0_i32_0, %c0_i32_1 : i32, i32, i32, i32
  }
  func.func @transform_3(%arg0: i32) -> (i32, i32) {
    %c0_i32 = arith.constant 0 : i32
    %c0_i32_0 = arith.constant 0 : i32
    %c0_i32_1 = arith.constant 0 : i32
    return %c0_i32, %c0_i32_0 : i32, i32
  }
  func.func @transform_4(%arg0: i32) -> (i32, i32) {
    %c0_i32 = arith.constant 0 : i32
    %c0_i32_0 = arith.constant 0 : i32
    %c0_i32_1 = arith.constant 0 : i32
    return %c0_i32, %c0_i32_0 : i32, i32
  }
  func.func @transform_5(%arg0: i32) -> (i32, i32, i32, i32) {
    %c0_i32 = arith.constant 0 : i32
    %c0_i32_0 = arith.constant 0 : i32
    %c0_i32_1 = arith.constant 0 : i32
    %c0_i32_2 = arith.constant 0 : i32
    return %arg0, %c0_i32, %c0_i32_0, %c0_i32_1 : i32, i32, i32, i32
  }
}

</mosaic_0001>

<llo_original>
// kernel: _lambda_.1
$region0: #{_lambda_.1}
  #allocation0 [shape = 'u32[]', space=smem, size = 0x4, offset = 0x4, fixed_abs, tag = 'smem constant byte address 0x4 - core index']
  #allocation1 [shape = 'u32[144,128]{1,0:T(1,128)}', space=vmem, size = 0x12000, scoped, tag = 'internal scratch']
  %s0 = inlined_call_operand.vmem [shape: bf16[2,18,18,32], index: 0, kind: input, shape index: {}]
  %s1 = inlined_call_operand.vmem [shape: bf16[288,128], index: 1, kind: input, shape index: {}]
  %s2 = inlined_call_operand.vmem [shape: bf16[2,10,10,64], index: 2, kind: input, shape index: {}]
  %s3 = inlined_call_operand.vmem [shape: bf16[576,128], index: 3, kind: input, shape index: {}]
  %s4 = inlined_call_operand.vmem [shape: bf16[256,64], index: 4, kind: input, shape index: {}]
  %s5 = inlined_call_operand.hbm [shape: f32[2,16,16,128], index: 5, kind: output, shape index: {}]
  %s6 = sld [smem:[#allocation0]]
  $region53: #{_lambda_.1} parent=0
    _
  %s8 = ssub.s32 1, %s6
  %s9 = scalar_select 0, %s8, %s6
  $region1: #{_lambda_.1} parent=0
    #allocation2 [shape = 'u8[262144]{0}', space=vmem, size = 0x40000, scoped, tag = 'output window, operand 0']
    #allocation3 [shape = 's32[2]{0}', space=sflag, size = 0x8, scoped, tag = 'scoped memory for _lambda_.1']
    %10 = vsyncpa [#allocation3], 0
    %s11 = scalar_lea.sflag [#allocation3], 1
    %12 = vsyncpa %s11, 0
    loop: start=0, step=1, limit=4
    $region2: #{_lambda_.1} parent=1 // loop_pre_header
      _
    $region3: #{_lambda_.1} parent=1 // loop_header
      %s14 = sphi 0, %s18
      %p15 = scmp.ge.s32.totalorder %s14, 4
      %s24 = sphi 0, %s26
      %s27 = sphi 0, %s24
      %s28 = sphi 0, %s27
      %s44 = sphi 0, %s28
      %s48 = sphi 0, %s48
      %s50 = sphi 0, %s48
      %s51 = sphi 0, %s50
      %s65 = sphi 0, %s51
      %s71 = sphi 0, %s73
      %s74 = sphi 0, %s71
      %s75 = sphi 0, %s74
      %s91 = sphi 0, %s75
      %s95 = sphi 0, %s95
      %s97 = sphi 0, %s95
      %s98 = sphi 0, %s97
      %s112 = sphi 0, %s98
      %s116 = sphi 0, %s116
      %s118 = sphi 0, %s116
      %s119 = sphi 0, %s118
      %s133 = sphi 0, %s119
      %s139 = sphi 0, %s141
      %s142 = sphi 0, %s139
      %s143 = sphi 0, %s142
      %s159 = sphi 0, %s143
    $region4: #{_lambda_.1} parent=1 // loop_header_branch
      %17 = sbr.rel (%p15) target = $region8
    $region5: #{_lambda_.1} parent=1 // loop_body
      %s19 = ssub.s32 %s14, 1
      %s20 = ssub.s32 %s14, 2
      %s21 = sadd.s32 %s14, 1
      %s22 = ssub.s32 %s14, %s21
      %p23 = scmp.eq.s32.totalorder %s22, 0
      %s25 = sadd.s32 %s24, 1
      %s26 = scalar_select %p23, %s24, %s25
      %p29 = pneg %p23
      %p30 = scmp.eq.s32.totalorder %s14, 1
      %p31 = por %p29, %p30
      %p32 = scmp.ne.s32.totalorder %s24, %s27
      %p33 = scmp.eq.s32.totalorder %s14, 0
      %p34 = por %p32, %p33
      %p35 = scmp.ne.s32.totalorder %s24, %s27
      %p36 = scmp.eq.s32.totalorder %s19, 1
      %p37 = por %p35, %p36
      %p38 = scmp.ne.s32.totalorder %s27, %s28
      %p39 = scmp.eq.s32.totalorder %s19, 0
      %p40 = por %p38, %p39
      %p41 = scmp.ne.s32.totalorder %s27, %s28
      %p42 = scmp.eq.s32.totalorder %s20, 1
      %p43 = por %p41, %p42
      %p45 = scmp.ne.s32.totalorder %s28, %s44
      %p46 = scmp.eq.s32.totalorder %s20, 0
      %p47 = por %p45, %p46
      %s49 = sadd.s32 %s48, 1
      %p52 = scmp.eq.s32.totalorder %s14, 1
      %p53 = scmp.ne.s32.totalorder %s48, %s50
      %p54 = scmp.eq.s32.totalorder %s14, 0
      %p55 = por %p53, %p54
      %p56 = scmp.ne.s32.totalorder %s48, %s50
      %p57 = scmp.eq.s32.totalorder %s19, 1
      %p58 = por %p56, %p57
      %p59 = scmp.ne.s32.totalorder %s50, %s51
      %p60 = scmp.eq.s32.totalorder %s19, 0
      %p61 = por %p59, %p60
      %p62 = scmp.ne.s32.totalorder %s50, %s51
      %p63 = scmp.eq.s32.totalorder %s20, 1
      %p64 = por %p62, %p63
      %p66 = scmp.ne.s32.totalorder %s51, %s65
      %p67 = scmp.eq.s32.totalorder %s20, 0
      %p68 = por %p66, %p67
      %s69 = ssub.s32 %s14, %s21
      %p70 = scmp.eq.s32.totalorder %s69, 0
      %s72 = sadd.s32 %s71, 1
      %s73 = scalar_select %p70, %s71, %s72
      %p76 = pneg %p70
      %p77 = scmp.eq.s32.totalorder %s14, 1
      %p78 = por %p76, %p77
      %p79 = scmp.ne.s32.totalorder %s71, %s74
      %p80 = scmp.eq.s32.totalorder %s14, 0
      %p81 = por %p79, %p80
      %p82 = scmp.ne.s32.totalorder %s71, %s74
      %p83 = scmp.eq.s32.totalorder %s19, 1
      %p84 = por %p82, %p83
      %p85 = scmp.ne.s32.totalorder %s74, %s75
      %p86 = scmp.eq.s32.totalorder %s19, 0
      %p87 = por %p85, %p86
      %p88 = scmp.ne.s32.totalorder %s74, %s75
      %p89 = scmp.eq.s32.totalorder %s20, 1
      %p90 = por %p88, %p89
      %p92 = scmp.ne.s32.totalorder %s75, %s91
      %p93 = scmp.eq.s32.totalorder %s20, 0
      %p94 = por %p92, %p93
      %s96 = sadd.s32 %s95, 1
      %p99 = scmp.eq.s32.totalorder %s14, 1
      %p100 = scmp.ne.s32.totalorder %s95, %s97
      %p101 = scmp.eq.s32.totalorder %s14, 0
      %p102 = por %p100, %p101
      %p103 = scmp.ne.s32.totalorder %s95, %s97
      %p104 = scmp.eq.s32.totalorder %s19, 1
      %p105 = por %p103, %p104
      %p106 = scmp.ne.s32.totalorder %s97, %s98
      %p107 = scmp.eq.s32.totalorder %s19, 0
      %p108 = por %p106, %p107
      %p109 = scmp.ne.s32.totalorder %s97, %s98
      %p110 = scmp.eq.s32.totalorder %s20, 1
      %p111 = por %p109, %p110
      %p113 = scmp.ne.s32.totalorder %s98, %s112
      %p114 = scmp.eq.s32.totalorder %s20, 0
      %p115 = por %p113, %p114
      %s117 = sadd.s32 %s116, 1
      %p120 = scmp.eq.s32.totalorder %s14, 1
      %p121 = scmp.ne.s32.totalorder %s116, %s118
      %p122 = scmp.eq.s32.totalorder %s14, 0
      %p123 = por %p121, %p122
      %p124 = scmp.ne.s32.totalorder %s116, %s118
      %p125 = scmp.eq.s32.totalorder %s19, 1
      %p126 = por %p124, %p125
      %p127 = scmp.ne.s32.totalorder %s118, %s119
      %p128 = scmp.eq.s32.totalorder %s19, 0
      %p129 = por %p127, %p128
      %p130 = scmp.ne.s32.totalorder %s118, %s119
      %p131 = scmp.eq.s32.totalorder %s20, 1
      %p132 = por %p130, %p131
      %p134 = scmp.ne.s32.totalorder %s119, %s133
      %p135 = scmp.eq.s32.totalorder %s20, 0
      %p136 = por %p134, %p135
      %s137 = ssub.s32 %s14, %s21
      %p138 = scmp.eq.s32.totalorder %s137, 0
      %s140 = sadd.s32 %s139, 1
      %s141 = scalar_select %p138, %s139, %s140
      %p144 = pneg %p138
      %p145 = scmp.eq.s32.totalorder %s14, 1
      %p146 = por %p144, %p145
      %p147 = scmp.ne.s32.totalorder %s139, %s142
      %p148 = scmp.eq.s32.totalorder %s14, 0
      %p149 = por %p147, %p148
      %p150 = scmp.ne.s32.totalorder %s139, %s142
      %p151 = scmp.eq.s32.totalorder %s19, 1
      %p152 = por %p150, %p151
      %p153 = scmp.ne.s32.totalorder %s142, %s143
      %p154 = scmp.eq.s32.totalorder %s19, 0
      %p155 = por %p153, %p154
      %p156 = scmp.ne.s32.totalorder %s142, %s143
      %p157 = scmp.eq.s32.totalorder %s20, 1
      %p158 = por %p156, %p157
      %p160 = scmp.ne.s32.totalorder %s143, %s159
      %p161 = scmp.eq.s32.totalorder %s20, 0
      %p162 = por %p160, %p161
      %p163 = scmp.le.s32.totalorder 1, %s14
      %p164 = scmp.lt.s32.totalorder %s14, 3
      %p165 = pnand %p163, %p164
      %p166 = pneg %p165
      // Predicated region
      $region9: #{_lambda_.1} parent=5 // pred_check
        _
      $region10: #{_lambda_.1} parent=5 // pred_check_branch
        %168 = sbr.rel (%p165) target = $region12
      $region11: #{_lambda_.1} parent=5 // pred_region
        %s169 = ssub.s32 %s14, 1
        // Predicated region
        $region13: #{_lambda_.1} parent=11 // pred_check
          %p170 = pneg %p61
        $region14: #{_lambda_.1} parent=11 // pred_check_branch
          %172 = sbr.rel (%p170) target = $region16
        $region15: #{_lambda_.1} parent=11 // pred_region
          _
        $region16: #{_lambda_.1} parent=11 // pred_fallthru
          _
        // Predicated region
        $region17: #{_lambda_.1} parent=11 // pred_check
          %p173 = pneg %p108
        $region18: #{_lambda_.1} parent=11 // pred_check_branch
          %175 = sbr.rel (%p173) target = $region20
        $region19: #{_lambda_.1} parent=11 // pred_region
          _
        $region20: #{_lambda_.1} parent=11 // pred_fallthru
          _
        // Predicated region
        $region21: #{_lambda_.1} parent=11 // pred_check
          %p176 = pneg %p129
        $region22: #{_lambda_.1} parent=11 // pred_check_branch
          %178 = sbr.rel (%p176) target = $region24
        $region23: #{_lambda_.1} parent=11 // pred_region
          _
        $region24: #{_lambda_.1} parent=11 // pred_fallthru
          _
      $region12: #{_lambda_.1} parent=5 // pred_fallthru
        _
      %p179 = scmp.lt.s32.totalorder %s14, 2
      // Predicated region
      $region25: #{_lambda_.1} parent=5 // pred_check
        %p180 = pneg %p179
      $region26: #{_lambda_.1} parent=5 // pred_check_branch
        %182 = sbr.rel (%p180) target = $region28
      $region27: #{_lambda_.1} parent=5 // pred_region
        // Predicated region
        $region29: #{_lambda_.1} parent=27 // pred_check
          %p183 = pneg %p34
        $region30: #{_lambda_.1} parent=27 // pred_check_branch
          %185 = sbr.rel (%p183) target = $region32
        $region31: #{_lambda_.1} parent=27 // pred_region
          %p186 = scmp.lt.s32.totalorder %s14, 1
          %s187 = scalar_select %p186, %s14, 1
          %s188 = smul.addr %s187, 54
          %s189 = smul.addr %s188, 4
          %s190 = scalar_lea.vmem %s0, %s189
        $region32: #{_lambda_.1} parent=27 // pred_fallthru
          _
        // Predicated region
        $region33: #{_lambda_.1} parent=27 // pred_check
          %p191 = pneg %p81
        $region34: #{_lambda_.1} parent=27 // pred_check_branch
          %193 = sbr.rel (%p191) target = $region36
        $region35: #{_lambda_.1} parent=27 // pred_region
          %p194 = scmp.lt.s32.totalorder %s14, 1
          %s195 = scalar_select %p194, %s14, 1
          %s196 = smul.addr %s195, 20
          %s197 = smul.addr %s196, 4
          %s198 = scalar_lea.vmem %s2, %s197
        $region36: #{_lambda_.1} parent=27 // pred_fallthru
          _
      $region28: #{_lambda_.1} parent=5 // pred_fallthru
        _
      %p199 = scmp.le.s32.totalorder 1, %s14
      %p200 = scmp.lt.s32.totalorder %s14, 3
      %p201 = pnand %p199, %p200
      %p202 = pneg %p201
      // Predicated region
      $region37: #{_lambda_.1} parent=5 // pred_check
        _
      $region38: #{_lambda_.1} parent=5 // pred_check_branch
        %204 = sbr.rel (%p201) target = $region40
      $region39: #{_lambda_.1} parent=5 // pred_region
        %s205 = ssub.s32 %s14, 1
        %p206 = scmp.lt.s32.totalorder %s19, 1
        %s207 = scalar_select %p206, %s19, 1
        %s208 = smul.addr %s207, 54
        %s209 = smul.addr %s208, 4
        %s210 = scalar_lea.vmem %s0, %s209
        %p211 = pneg %p40
        %p212 = pneg %p37
        %p213 = pneg %p61
        %p214 = pneg %p58
        %p215 = scmp.lt.s32.totalorder %s19, 1
        %s216 = scalar_select %p215, %s19, 1
        %s217 = smul.addr %s216, 20
        %s218 = smul.addr %s217, 4
        %s219 = scalar_lea.vmem %s2, %s218
        %p220 = pneg %p87
        %p221 = pneg %p84
        %p222 = pneg %p108
        %p223 = pneg %p105
        %p224 = pneg %p129
        %p225 = pneg %p126
        %p226 = pneg %p155
        %p227 = pneg %p152
        %s228 = sand.u32 %s142, 1
        %s229 = scalar_lea.sflag [#allocation3], %s228
        %s230 = sand.u32 %s142, 1
        %s231 = smul.addr %s230, 256
        %s232 = scalar_lea.vmem [#allocation2], %s231
        %p233 = scmp.lt.s32.totalorder %s19, 1
        %s234 = scalar_select %p233, %s19, 1
        %s235 = smul.addr %s234, 54
        %s236 = smul.addr %s235, 4
        %s237 = scalar_lea.vmem %s0, %s236
        %p238 = scmp.lt.s32.totalorder %s19, 1
        %s239 = scalar_select %p238, %s19, 1
        %s240 = smul.addr %s239, 20
        %s241 = smul.addr %s240, 4
        %s242 = scalar_lea.vmem %s2, %s241
        %v244 = vld [vmem:[%s237] sm:$0xf]
        %v245 = vld [vmem:[%s237 + $0x4] sm:$0xf]
        %v246 = vld [vmem:[%s237 + $0x8] sm:$0x1]
        %v247 = vld [vmem:[%s237 + $0xc] sm:$0xf]
        %v248 = vld [vmem:[%s237 + $0x10] sm:$0xf]
        %v249 = vld [vmem:[%s237 + $0x14] sm:$0x1]
        %v250 = vld [vmem:[%s237 + $0x18] sm:$0xf]
        %v251 = vld [vmem:[%s237 + $0x1c] sm:$0xf]
        %v252 = vld [vmem:[%s237 + $0x20] sm:$0x1]
        %v253 = vld [vmem:[%s237 + $0x24] sm:$0xf]
        %v254 = vld [vmem:[%s237 + $0x28] sm:$0xf]
        %v255 = vld [vmem:[%s237 + $0x2c] sm:$0x1]
        %v256 = vld [vmem:[%s237 + $0x30] sm:$0xf]
        %v257 = vld [vmem:[%s237 + $0x34] sm:$0xf]
        %v258 = vld [vmem:[%s237 + $0x38] sm:$0x1]
        %v259 = vld [vmem:[%s237 + $0x3c] sm:$0xf]
        %v260 = vld [vmem:[%s237 + $0x40] sm:$0xf]
        %v261 = vld [vmem:[%s237 + $0x44] sm:$0x1]
        %v262 = vld [vmem:[%s237 + $0x48] sm:$0xf]
        %v263 = vld [vmem:[%s237 + $0x4c] sm:$0xf]
        %v264 = vld [vmem:[%s237 + $0x50] sm:$0x1]
        %v265 = vld [vmem:[%s237 + $0x54] sm:$0xf]
        %v266 = vld [vmem:[%s237 + $0x58] sm:$0xf]
        %v267 = vld [vmem:[%s237 + $0x5c] sm:$0x1]
        %v268 = vld [vmem:[%s237 + $0x60] sm:$0xf]
        %v269 = vld [vmem:[%s237 + $0x64] sm:$0xf]
        %v270 = vld [vmem:[%s237 + $0x68] sm:$0x1]
        %v271 = vld [vmem:[%s237 + $0x6c] sm:$0xf]
        %v272 = vld [vmem:[%s237 + $0x70] sm:$0xf]
        %v273 = vld [vmem:[%s237 + $0x74] sm:$0x1]
        %v274 = vld [vmem:[%s237 + $0x78] sm:$0xf]
        %v275 = vld [vmem:[%s237 + $0x7c] sm:$0xf]
        %v276 = vld [vmem:[%s237 + $0x80] sm:$0x1]
        %v277 = vld [vmem:[%s237 + $0x84] sm:$0xf]
        %v278 = vld [vmem:[%s237 + $0x88] sm:$0xf]
        %v279 = vld [vmem:[%s237 + $0x8c] sm:$0x1]
        %v280 = vld [vmem:[%s237 + $0x90] sm:$0xf]
        %v281 = vld [vmem:[%s237 + $0x94] sm:$0xf]
        %v282 = vld [vmem:[%s237 + $0x98] sm:$0x1]
        %v283 = vld [vmem:[%s237 + $0x9c] sm:$0xf]
        %v284 = vld [vmem:[%s237 + $0xa0] sm:$0xf]
        %v285 = vld [vmem:[%s237 + $0xa4] sm:$0x1]
        %v286 = vld [vmem:[%s237 + $0xa8] sm:$0xf]
        %v287 = vld [vmem:[%s237 + $0xac] sm:$0xf]
        %v288 = vld [vmem:[%s237 + $0xb0] sm:$0x1]
        %v289 = vld [vmem:[%s237 + $0xb4] sm:$0xf]
        %v290 = vld [vmem:[%s237 + $0xb8] sm:$0xf]
        %v291 = vld [vmem:[%s237 + $0xbc] sm:$0x1]
        %v292 = vld [vmem:[%s237 + $0xc0] sm:$0xf]
        %v293 = vld [vmem:[%s237 + $0xc4] sm:$0xf]
        %v294 = vld [vmem:[%s237 + $0xc8] sm:$0x1]
        %v295 = vld [vmem:[%s237 + $0xcc] sm:$0xf]
        %v296 = vld [vmem:[%s237 + $0xd0] sm:$0xf]
        %v297 = vld [vmem:[%s237 + $0xd4] sm:$0x1]
        %vm298 = vsmask.f32 3328
        %vm299 = vsmask.f32 7440
        %vm300 = vmor %vm298, %vm299
        %v302 = vshrl.u32 %v244, 16
        %v304 = vrot.slane %v302, 4
        %v305 = vshll.u32 %v244, 16
        %v307 = vrot.slane %v305, 5
        %v308 = vor.u32 %v304, %v307
        %v309 = vrot.slane %v308, 4
        %v311 = vshll.u32 %v245, 16
        %v313 = vrot.slane %v311, 5
        %v314 = vsel %vm300, %v309, %v313
        %v315 = vshrl.u32 %v245, 16
        %v317 = vrot.slane %v315, 4
        %v318 = vor.u32 %v317, %v313
        %v319 = vrot.slane %v318, 4
        %v321 = vshll.u32 %v246, 16
        %v323 = vrot.slane %v321, 5
        %v324 = vsel %vm300, %v319, %v323
        %v326 = vshrl.u32 %v247, 16
        %v328 = vrot.slane %v326, 4
        %v329 = vshll.u32 %v247, 16
        %v331 = vrot.slane %v329, 5
        %v332 = vor.u32 %v328, %v331
        %v333 = vrot.slane %v332, 4
        %v335 = vshll.u32 %v248, 16
        %v337 = vrot.slane %v335, 5
        %v338 = vsel %vm300, %v333, %v337
        %v339 = vshrl.u32 %v248, 16
        %v341 = vrot.slane %v339, 4
        %v342 = vor.u32 %v341, %v337
        %v343 = vrot.slane %v342, 4
        %v345 = vshll.u32 %v249, 16
        %v347 = vrot.slane %v345, 5
        %v348 = vsel %vm300, %v343, %v347
        %v350 = vshrl.u32 %v250, 16
        %v352 = vrot.slane %v350, 4
        %v353 = vshll.u32 %v250, 16
        %v355 = vrot.slane %v353, 5
        %v356 = vor.u32 %v352, %v355
        %v357 = vrot.slane %v356, 4
        %v359 = vshll.u32 %v251, 16
        %v361 = vrot.slane %v359, 5
        %v362 = vsel %vm300, %v357, %v361
        %v363 = vshrl.u32 %v251, 16
        %v365 = vrot.slane %v363, 4
        %v366 = vor.u32 %v365, %v361
        %v367 = vrot.slane %v366, 4
        %v369 = vshll.u32 %v252, 16
        %v371 = vrot.slane %v369, 5
        %v372 = vsel %vm300, %v367, %v371
        %v374 = vshrl.u32 %v253, 16
        %v376 = vrot.slane %v374, 4
        %v377 = vshll.u32 %v253, 16
        %v379 = vrot.slane %v377, 5
        %v380 = vor.u32 %v376, %v379
        %v381 = vrot.slane %v380, 4
        %v383 = vshll.u32 %v254, 16
        %v385 = vrot.slane %v383, 5
        %v386 = vsel %vm300, %v381, %v385
        %v387 = vshrl.u32 %v254, 16
        %v389 = vrot.slane %v387, 4
        %v390 = vor.u32 %v389, %v385
        %v391 = vrot.slane %v390, 4
        %v393 = vshll.u32 %v255, 16
        %v395 = vrot.slane %v393, 5
        %v396 = vsel %vm300, %v391, %v395
        %v398 = vshrl.u32 %v256, 16
        %v400 = vrot.slane %v398, 4
        %v401 = vshll.u32 %v256, 16
        %v403 = vrot.slane %v401, 5
        %v404 = vor.u32 %v400, %v403
        %v405 = vrot.slane %v404, 4
        %v407 = vshll.u32 %v257, 16
        %v409 = vrot.slane %v407, 5
        %v410 = vsel %vm300, %v405, %v409
        %v411 = vshrl.u32 %v257, 16
        %v413 = vrot.slane %v411, 4
        %v414 = vor.u32 %v413, %v409
        %v415 = vrot.slane %v414, 4
        %v417 = vshll.u32 %v258, 16
        %v419 = vrot.slane %v417, 5
        %v420 = vsel %vm300, %v415, %v419
        %v422 = vshrl.u32 %v259, 16
        %v424 = vrot.slane %v422, 4
        %v425 = vshll.u32 %v259, 16
        %v427 = vrot.slane %v425, 5
        %v428 = vor.u32 %v424, %v427
        %v429 = vrot.slane %v428, 4
        %v431 = vshll.u32 %v260, 16
        %v433 = vrot.slane %v431, 5
        %v434 = vsel %vm300, %v429, %v433
        %v435 = vshrl.u32 %v260, 16
        %v437 = vrot.slane %v435, 4
        %v438 = vor.u32 %v437, %v433
        %v439 = vrot.slane %v438, 4
        %v441 = vshll.u32 %v261, 16
        %v443 = vrot.slane %v441, 5
        %v444 = vsel %vm300, %v439, %v443
        %v446 = vshrl.u32 %v262, 16
        %v448 = vrot.slane %v446, 4
        %v449 = vshll.u32 %v262, 16
        %v451 = vrot.slane %v449, 5
        %v452 = vor.u32 %v448, %v451
        %v453 = vrot.slane %v452, 4
        %v455 = vshll.u32 %v263, 16
        %v457 = vrot.slane %v455, 5
        %v458 = vsel %vm300, %v453, %v457
        %v459 = vshrl.u32 %v263, 16
        %v461 = vrot.slane %v459, 4
        %v462 = vor.u32 %v461, %v457
        %v463 = vrot.slane %v462, 4
        %v465 = vshll.u32 %v264, 16
        %v467 = vrot.slane %v465, 5
        %v468 = vsel %vm300, %v463, %v467
        %v470 = vshrl.u32 %v265, 16
        %v472 = vrot.slane %v470, 4
        %v473 = vshll.u32 %v265, 16
        %v475 = vrot.slane %v473, 5
        %v476 = vor.u32 %v472, %v475
        %v477 = vrot.slane %v476, 4
        %v479 = vshll.u32 %v266, 16
        %v481 = vrot.slane %v479, 5
        %v482 = vsel %vm300, %v477, %v481
        %v483 = vshrl.u32 %v266, 16
        %v485 = vrot.slane %v483, 4
        %v486 = vor.u32 %v485, %v481
        %v487 = vrot.slane %v486, 4
        %v489 = vshll.u32 %v267, 16
        %v491 = vrot.slane %v489, 5
        %v492 = vsel %vm300, %v487, %v491
        %v494 = vshrl.u32 %v268, 16
        %v496 = vrot.slane %v494, 4
        %v497 = vshll.u32 %v268, 16
        %v499 = vrot.slane %v497, 5
        %v500 = vor.u32 %v496, %v499
        %v501 = vrot.slane %v500, 4
        %v503 = vshll.u32 %v269, 16
        %v505 = vrot.slane %v503, 5
        %v506 = vsel %vm300, %v501, %v505
        %v507 = vshrl.u32 %v269, 16
        %v509 = vrot.slane %v507, 4
        %v510 = vor.u32 %v509, %v505
        %v511 = vrot.slane %v510, 4
        %v513 = vshll.u32 %v270, 16
        %v515 = vrot.slane %v513, 5
        %v516 = vsel %vm300, %v511, %v515
        %v518 = vshrl.u32 %v271, 16
        %v520 = vrot.slane %v518, 4
        %v521 = vshll.u32 %v271, 16
        %v523 = vrot.slane %v521, 5
        %v524 = vor.u32 %v520, %v523
        %v525 = vrot.slane %v524, 4
        %v527 = vshll.u32 %v272, 16
        %v529 = vrot.slane %v527, 5
        %v530 = vsel %vm300, %v525, %v529
        %v531 = vshrl.u32 %v272, 16
        %v533 = vrot.slane %v531, 4
        %v534 = vor.u32 %v533, %v529
        %v535 = vrot.slane %v534, 4
        %v537 = vshll.u32 %v273, 16
        %v539 = vrot.slane %v537, 5
        %v540 = vsel %vm300, %v535, %v539
        %v542 = vshrl.u32 %v274, 16
        %v544 = vrot.slane %v542, 4
        %v545 = vshll.u32 %v274, 16
        %v547 = vrot.slane %v545, 5
        %v548 = vor.u32 %v544, %v547
        %v549 = vrot.slane %v548, 4
        %v551 = vshll.u32 %v275, 16
        %v553 = vrot.slane %v551, 5
        %v554 = vsel %vm300, %v549, %v553
        %v555 = vshrl.u32 %v275, 16
        %v557 = vrot.slane %v555, 4
        %v558 = vor.u32 %v557, %v553
        %v559 = vrot.slane %v558, 4
        %v561 = vshll.u32 %v276, 16
        %v563 = vrot.slane %v561, 5
        %v564 = vsel %vm300, %v559, %v563
        %v566 = vshrl.u32 %v277, 16
        %v568 = vrot.slane %v566, 4
        %v569 = vshll.u32 %v277, 16
        %v571 = vrot.slane %v569, 5
        %v572 = vor.u32 %v568, %v571
        %v573 = vrot.slane %v572, 4
        %v575 = vshll.u32 %v278, 16
        %v577 = vrot.slane %v575, 5
        %v578 = vsel %vm300, %v573, %v577
        %v579 = vshrl.u32 %v278, 16
        %v581 = vrot.slane %v579, 4
        %v582 = vor.u32 %v581, %v577
        %v583 = vrot.slane %v582, 4
        %v585 = vshll.u32 %v279, 16
        %v587 = vrot.slane %v585, 5
        %v588 = vsel %vm300, %v583, %v587
        %v590 = vshrl.u32 %v280, 16
        %v592 = vrot.slane %v590, 4
        %v593 = vshll.u32 %v280, 16
        %v595 = vrot.slane %v593, 5
        %v596 = vor.u32 %v592, %v595
        %v597 = vrot.slane %v596, 4
        %v599 = vshll.u32 %v281, 16
        %v601 = vrot.slane %v599, 5
        %v602 = vsel %vm300, %v597, %v601
        %v603 = vshrl.u32 %v281, 16
        %v605 = vrot.slane %v603, 4
        %v606 = vor.u32 %v605, %v601
        %v607 = vrot.slane %v606, 4
        %v609 = vshll.u32 %v282, 16
        %v611 = vrot.slane %v609, 5
        %v612 = vsel %vm300, %v607, %v611
        %v614 = vshrl.u32 %v283, 16
        %v616 = vrot.slane %v614, 4
        %v617 = vshll.u32 %v283, 16
        %v619 = vrot.slane %v617, 5
        %v620 = vor.u32 %v616, %v619
        %v621 = vrot.slane %v620, 4
        %v623 = vshll.u32 %v284, 16
        %v625 = vrot.slane %v623, 5
        %v626 = vsel %vm300, %v621, %v625
        %v627 = vshrl.u32 %v284, 16
        %v629 = vrot.slane %v627, 4
        %v630 = vor.u32 %v629, %v625
        %v631 = vrot.slane %v630, 4
        %v633 = vshll.u32 %v285, 16
        %v635 = vrot.slane %v633, 5
        %v636 = vsel %vm300, %v631, %v635
        %v638 = vshrl.u32 %v286, 16
        %v640 = vrot.slane %v638, 4
        %v641 = vshll.u32 %v286, 16
        %v643 = vrot.slane %v641, 5
        %v644 = vor.u32 %v640, %v643
        %v645 = vrot.slane %v644, 4
        %v647 = vshll.u32 %v287, 16
        %v649 = vrot.slane %v647, 5
        %v650 = vsel %vm300, %v645, %v649
        %v651 = vshrl.u32 %v287, 16
        %v653 = vrot.slane %v651, 4
        %v654 = vor.u32 %v653, %v649
        %v655 = vrot.slane %v654, 4
        %v657 = vshll.u32 %v288, 16
        %v659 = vrot.slane %v657, 5
        %v660 = vsel %vm300, %v655, %v659
        %v662 = vshrl.u32 %v289, 16
        %v664 = vrot.slane %v662, 4
        %v665 = vshll.u32 %v289, 16
        %v667 = vrot.slane %v665, 5
        %v668 = vor.u32 %v664, %v667
        %v669 = vrot.slane %v668, 4
        %v671 = vshll.u32 %v290, 16
        %v673 = vrot.slane %v671, 5
        %v674 = vsel %vm300, %v669, %v673
        %v675 = vshrl.u32 %v290, 16
        %v677 = vrot.slane %v675, 4
        %v678 = vor.u32 %v677, %v673
        %v679 = vrot.slane %v678, 4
        %v681 = vshll.u32 %v291, 16
        %v683 = vrot.slane %v681, 5
        %v684 = vsel %vm300, %v679, %v683
        %vm733 = vcmask 1042432
        %vm734 = vcmask 1046532
        %vm735 = vmor %vm733, %vm734
        %v736 = vrot.slane %v244, 5
        %v737 = vrot.slane %v736, 4
        %v738 = vrot.slane %v245, 5
        %v739 = vsel %vm735, %v737, %v738
        %v740 = vrot.slane %v738, 4
        %v741 = vrot.slane %v246, 5
        %v742 = vsel %vm735, %v740, %v741
        %v743 = vrot.slane %v247, 5
        %v744 = vrot.slane %v743, 4
        %v745 = vrot.slane %v248, 5
        %v746 = vsel %vm735, %v744, %v745
        %v747 = vrot.slane %v745, 4
        %v748 = vrot.slane %v249, 5
        %v749 = vsel %vm735, %v747, %v748
        %v750 = vrot.slane %v250, 5
        %v751 = vrot.slane %v750, 4
        %v752 = vrot.slane %v251, 5
        %v753 = vsel %vm735, %v751, %v752
        %v754 = vrot.slane %v752, 4
        %v755 = vrot.slane %v252, 5
        %v756 = vsel %vm735, %v754, %v755
        %v757 = vrot.slane %v253, 5
        %v758 = vrot.slane %v757, 4
        %v759 = vrot.slane %v254, 5
        %v760 = vsel %vm735, %v758, %v759
        %v761 = vrot.slane %v759, 4
        %v762 = vrot.slane %v255, 5
        %v763 = vsel %vm735, %v761, %v762
        %v764 = vrot.slane %v256, 5
        %v765 = vrot.slane %v764, 4
        %v766 = vrot.slane %v257, 5
        %v767 = vsel %vm735, %v765, %v766
        %v768 = vrot.slane %v766, 4
        %v769 = vrot.slane %v258, 5
        %v770 = vsel %vm735, %v768, %v769
        %v771 = vrot.slane %v259, 5
        %v772 = vrot.slane %v771, 4
        %v773 = vrot.slane %v260, 5
        %v774 = vsel %vm735, %v772, %v773
        %v775 = vrot.slane %v773, 4
        %v776 = vrot.slane %v261, 5
        %v777 = vsel %vm735, %v775, %v776
        %v778 = vrot.slane %v262, 5
        %v779 = vrot.slane %v778, 4
        %v780 = vrot.slane %v263, 5
        %v781 = vsel %vm735, %v779, %v780
        %v782 = vrot.slane %v780, 4
        %v783 = vrot.slane %v264, 5
        %v784 = vsel %vm735, %v782, %v783
        %v785 = vrot.slane %v265, 5
        %v786 = vrot.slane %v785, 4
        %v787 = vrot.slane %v266, 5
        %v788 = vsel %vm735, %v786, %v787
        %v789 = vrot.slane %v787, 4
        %v790 = vrot.slane %v267, 5
        %v791 = vsel %vm735, %v789, %v790
        %v792 = vrot.slane %v268, 5
        %v793 = vrot.slane %v792, 4
        %v794 = vrot.slane %v269, 5
        %v795 = vsel %vm735, %v793, %v794
        %v796 = vrot.slane %v794, 4
        %v797 = vrot.slane %v270, 5
        %v798 = vsel %vm735, %v796, %v797
        %v799 = vrot.slane %v271, 5
        %v800 = vrot.slane %v799, 4
        %v801 = vrot.slane %v272, 5
        %v802 = vsel %vm735, %v800, %v801
        %v803 = vrot.slane %v801, 4
        %v804 = vrot.slane %v273, 5
        %v805 = vsel %vm735, %v803, %v804
        %v806 = vrot.slane %v274, 5
        %v807 = vrot.slane %v806, 4
        %v808 = vrot.slane %v275, 5
        %v809 = vsel %vm735, %v807, %v808
        %v810 = vrot.slane %v808, 4
        %v811 = vrot.slane %v276, 5
        %v812 = vsel %vm735, %v810, %v811
        %v813 = vrot.slane %v277, 5
        %v814 = vrot.slane %v813, 4
        %v815 = vrot.slane %v278, 5
        %v816 = vsel %vm735, %v814, %v815
        %v817 = vrot.slane %v815, 4
        %v818 = vrot.slane %v279, 5
        %v819 = vsel %vm735, %v817, %v818
        %v820 = vrot.slane %v280, 5
        %v821 = vrot.slane %v820, 4
        %v822 = vrot.slane %v281, 5
        %v823 = vsel %vm735, %v821, %v822
        %v824 = vrot.slane %v822, 4
        %v825 = vrot.slane %v282, 5
        %v826 = vsel %vm735, %v824, %v825
        %v827 = vrot.slane %v283, 5
        %v828 = vrot.slane %v827, 4
        %v829 = vrot.slane %v284, 5
        %v830 = vsel %vm735, %v828, %v829
        %v831 = vrot.slane %v829, 4
        %v832 = vrot.slane %v285, 5
        %v833 = vsel %vm735, %v831, %v832
        %v834 = vrot.slane %v286, 5
        %v835 = vrot.slane %v834, 4
        %v836 = vrot.slane %v287, 5
        %v837 = vsel %vm735, %v835, %v836
        %v838 = vrot.slane %v836, 4
        %v839 = vrot.slane %v288, 5
        %v840 = vsel %vm735, %v838, %v839
        %v841 = vrot.slane %v289, 5
        %v842 = vrot.slane %v841, 4
        %v843 = vrot.slane %v290, 5
        %v844 = vsel %vm735, %v842, %v843
        %v845 = vrot.slane %v843, 4
        %v846 = vrot.slane %v291, 5
        %v847 = vsel %vm735, %v845, %v846
        %v849 = vshrl.u32 %v292, 16
        %v851 = vrot.slane %v849, 4
        %v852 = vshll.u32 %v292, 16
        %v854 = vrot.slane %v852, 5
        %v855 = vor.u32 %v851, %v854
        %v856 = vrot.slane %v855, 4
        %v858 = vshll.u32 %v293, 16
        %v860 = vrot.slane %v858, 5
        %v861 = vsel %vm300, %v856, %v860
        %v862 = vshrl.u32 %v293, 16
        %v864 = vrot.slane %v862, 4
        %v865 = vor.u32 %v864, %v860
        %v866 = vrot.slane %v865, 4
        %v868 = vshll.u32 %v294, 16
        %v870 = vrot.slane %v868, 5
        %v871 = vsel %vm300, %v866, %v870
        %v875 = vrot.slane %v292, 5
        %v876 = vrot.slane %v875, 4
        %v877 = vrot.slane %v293, 5
        %v878 = vsel %vm735, %v876, %v877
        %v879 = vrot.slane %v877, 4
        %v880 = vrot.slane %v294, 5
        %v881 = vsel %vm735, %v879, %v880
        %v883 = vshrl.u32 %v295, 16
        %v885 = vrot.slane %v883, 4
        %v886 = vshll.u32 %v295, 16
        %v888 = vrot.slane %v886, 5
        %v889 = vor.u32 %v885, %v888
        %v890 = vrot.slane %v889, 4
        %v892 = vshll.u32 %v296, 16
        %v894 = vrot.slane %v892, 5
        %v895 = vsel %vm300, %v890, %v894
        %v896 = vshrl.u32 %v296, 16
        %v898 = vrot.slane %v896, 4
        %v899 = vor.u32 %v898, %v894
        %v900 = vrot.slane %v899, 4
        %v902 = vshll.u32 %v297, 16
        %v904 = vrot.slane %v902, 5
        %v905 = vsel %vm300, %v900, %v904
        %v909 = vrot.slane %v295, 5
        %v910 = vrot.slane %v909, 4
        %v911 = vrot.slane %v296, 5
        %v912 = vsel %vm735, %v910, %v911
        %v913 = vrot.slane %v911, 4
        %v914 = vrot.slane %v297, 5
        %v915 = vsel %vm735, %v913, %v914
        %v916 = vunpack.c.l.b16 %v244
        %v917 = vunpack.c.l.b16 %v245
        %v918 = vunpack.c.l.b16 %v247
        %v919 = vunpack.c.l.b16 %v248
        %v920 = vunpack.c.l.b16 %v250
        %v921 = vunpack.c.l.b16 %v251
        %v922 = vunpack.c.l.b16 %v253
        %v923 = vunpack.c.l.b16 %v254
        %v924 = vunpack.c.l.b16 %v256
        %v925 = vunpack.c.l.b16 %v257
        %v926 = vunpack.c.l.b16 %v259
        %v927 = vunpack.c.l.b16 %v260
        %v928 = vunpack.c.l.b16 %v262
        %v929 = vunpack.c.l.b16 %v263
        %v930 = vunpack.c.l.b16 %v265
        %v931 = vunpack.c.l.b16 %v266
        %v932 = vunpack.c.l.b16 %v268
        %v933 = vunpack.c.l.b16 %v269
        %v934 = vunpack.c.l.b16 %v271
        %v935 = vunpack.c.l.b16 %v272
        %v936 = vunpack.c.l.b16 %v274
        %v937 = vunpack.c.l.b16 %v275
        %v938 = vunpack.c.l.b16 %v277
        %v939 = vunpack.c.l.b16 %v278
        %v940 = vunpack.c.l.b16 %v280
        %v941 = vunpack.c.l.b16 %v281
        %v942 = vunpack.c.l.b16 %v283
        %v943 = vunpack.c.l.b16 %v284
        %v944 = vunpack.c.l.b16 %v286
        %v945 = vunpack.c.l.b16 %v287
        %v946 = vunpack.c.l.b16 %v289
        %v947 = vunpack.c.l.b16 %v290
        %v948 = vpack.c.b16 %v917, %v916
        %v949 = vpack.c.b16 %v919, %v918
        %v950 = vpack.c.b16 %v921, %v920
        %v951 = vpack.c.b16 %v923, %v922
        %v952 = vpack.c.b16 %v925, %v924
        %v953 = vpack.c.b16 %v927, %v926
        %v954 = vpack.c.b16 %v929, %v928
        %v955 = vpack.c.b16 %v931, %v930
        %v956 = vpack.c.b16 %v933, %v932
        %v957 = vpack.c.b16 %v935, %v934
        %v958 = vpack.c.b16 %v937, %v936
        %v959 = vpack.c.b16 %v939, %v938
        %v960 = vpack.c.b16 %v941, %v940
        %v961 = vpack.c.b16 %v943, %v942
        %v962 = vpack.c.b16 %v945, %v944
        %v963 = vpack.c.b16 %v947, %v946
        %v964 = vunpack.c.l.b16 %v314
        %v965 = vunpack.c.l.b16 %v324
        %v966 = vunpack.c.l.b16 %v338
        %v967 = vunpack.c.l.b16 %v348
        %v968 = vunpack.c.l.b16 %v362
        %v969 = vunpack.c.l.b16 %v372
        %v970 = vunpack.c.l.b16 %v386
        %v971 = vunpack.c.l.b16 %v396
        %v972 = vunpack.c.l.b16 %v410
        %v973 = vunpack.c.l.b16 %v420
        %v974 = vunpack.c.l.b16 %v434
        %v975 = vunpack.c.l.b16 %v444
        %v976 = vunpack.c.l.b16 %v458
        %v977 = vunpack.c.l.b16 %v468
        %v978 = vunpack.c.l.b16 %v482
        %v979 = vunpack.c.l.b16 %v492
        %v980 = vunpack.c.l.b16 %v506
        %v981 = vunpack.c.l.b16 %v516
        %v982 = vunpack.c.l.b16 %v530
        %v983 = vunpack.c.l.b16 %v540
        %v984 = vunpack.c.l.b16 %v554
        %v985 = vunpack.c.l.b16 %v564
        %v986 = vunpack.c.l.b16 %v578
        %v987 = vunpack.c.l.b16 %v588
        %v988 = vunpack.c.l.b16 %v602
        %v989 = vunpack.c.l.b16 %v612
        %v990 = vunpack.c.l.b16 %v626
        %v991 = vunpack.c.l.b16 %v636
        %v992 = vunpack.c.l.b16 %v650
        %v993 = vunpack.c.l.b16 %v660
        %v994 = vunpack.c.l.b16 %v674
        %v995 = vunpack.c.l.b16 %v684
        %v996 = vpack.c.b16 %v965, %v964
        %v997 = vpack.c.b16 %v967, %v966
        %v998 = vpack.c.b16 %v969, %v968
        %v999 = vpack.c.b16 %v971, %v970
        %v1000 = vpack.c.b16 %v973, %v972
        %v1001 = vpack.c.b16 %v975, %v974
        %v1002 = vpack.c.b16 %v977, %v976
        %v1003 = vpack.c.b16 %v979, %v978
        %v1004 = vpack.c.b16 %v981, %v980
        %v1005 = vpack.c.b16 %v983, %v982
        %v1006 = vpack.c.b16 %v985, %v984
        %v1007 = vpack.c.b16 %v987, %v986
        %v1008 = vpack.c.b16 %v989, %v988
        %v1009 = vpack.c.b16 %v991, %v990
        %v1010 = vpack.c.b16 %v993, %v992
        %v1011 = vpack.c.b16 %v995, %v994
        %1012 = vrot.lane.b32.xlu0 %v996, 32
        %v1013 = vpop.permute.xlu0 %1012
        %1014 = vrot.lane.b32.xlu0 %v997, 32
        %v1015 = vpop.permute.xlu0 %1014
        %1016 = vrot.lane.b32.xlu0 %v998, 32
        %v1017 = vpop.permute.xlu0 %1016
        %1018 = vrot.lane.b32.xlu0 %v999, 32
        %v1019 = vpop.permute.xlu0 %1018
        %1020 = vrot.lane.b32.xlu0 %v1000, 32
        %v1021 = vpop.permute.xlu0 %1020
        %1022 = vrot.lane.b32.xlu0 %v1001, 32
        %v1023 = vpop.permute.xlu0 %1022
        %1024 = vrot.lane.b32.xlu0 %v1002, 32
        %v1025 = vpop.permute.xlu0 %1024
        %1026 = vrot.lane.b32.xlu0 %v1003, 32
        %v1027 = vpop.permute.xlu0 %1026
        %1028 = vrot.lane.b32.xlu0 %v1004, 32
        %v1029 = vpop.permute.xlu0 %1028
        %1030 = vrot.lane.b32.xlu0 %v1005, 32
        %v1031 = vpop.permute.xlu0 %1030
        %1032 = vrot.lane.b32.xlu0 %v1006, 32
        %v1033 = vpop.permute.xlu0 %1032
        %1034 = vrot.lane.b32.xlu0 %v1007, 32
        %v1035 = vpop.permute.xlu0 %1034
        %1036 = vrot.lane.b32.xlu0 %v1008, 32
        %v1037 = vpop.permute.xlu0 %1036
        %1038 = vrot.lane.b32.xlu0 %v1009, 32
        %v1039 = vpop.permute.xlu0 %1038
        %1040 = vrot.lane.b32.xlu0 %v1010, 32
        %v1041 = vpop.permute.xlu0 %1040
        %1042 = vrot.lane.b32.xlu0 %v1011, 32
        %v1043 = vpop.permute.xlu0 %1042
        %v1044 = vunpack.c.l.b16 %v739
        %v1045 = vunpack.c.l.b16 %v742
        %v1046 = vunpack.c.l.b16 %v746
        %v1047 = vunpack.c.l.b16 %v749
        %v1048 = vunpack.c.l.b16 %v753
        %v1049 = vunpack.c.l.b16 %v756
        %v1050 = vunpack.c.l.b16 %v760
        %v1051 = vunpack.c.l.b16 %v763
        %v1052 = vunpack.c.l.b16 %v767
        %v1053 = vunpack.c.l.b16 %v770
        %v1054 = vunpack.c.l.b16 %v774
        %v1055 = vunpack.c.l.b16 %v777
        %v1056 = vunpack.c.l.b16 %v781
        %v1057 = vunpack.c.l.b16 %v784
        %v1058 = vunpack.c.l.b16 %v788
        %v1059 = vunpack.c.l.b16 %v791
        %v1060 = vunpack.c.l.b16 %v795
        %v1061 = vunpack.c.l.b16 %v798
        %v1062 = vunpack.c.l.b16 %v802
        %v1063 = vunpack.c.l.b16 %v805
        %v1064 = vunpack.c.l.b16 %v809
        %v1065 = vunpack.c.l.b16 %v812
        %v1066 = vunpack.c.l.b16 %v816
        %v1067 = vunpack.c.l.b16 %v819
        %v1068 = vunpack.c.l.b16 %v823
        %v1069 = vunpack.c.l.b16 %v826
        %v1070 = vunpack.c.l.b16 %v830
        %v1071 = vunpack.c.l.b16 %v833
        %v1072 = vunpack.c.l.b16 %v837
        %v1073 = vunpack.c.l.b16 %v840
        %v1074 = vunpack.c.l.b16 %v844
        %v1075 = vunpack.c.l.b16 %v847
        %v1076 = vpack.c.b16 %v1045, %v1044
        %v1077 = vpack.c.b16 %v1047, %v1046
        %v1078 = vpack.c.b16 %v1049, %v1048
        %v1079 = vpack.c.b16 %v1051, %v1050
        %v1080 = vpack.c.b16 %v1053, %v1052
        %v1081 = vpack.c.b16 %v1055, %v1054
        %v1082 = vpack.c.b16 %v1057, %v1056
        %v1083 = vpack.c.b16 %v1059, %v1058
        %v1084 = vpack.c.b16 %v1061, %v1060
        %v1085 = vpack.c.b16 %v1063, %v1062
        %v1086 = vpack.c.b16 %v1065, %v1064
        %v1087 = vpack.c.b16 %v1067, %v1066
        %v1088 = vpack.c.b16 %v1069, %v1068
        %v1089 = vpack.c.b16 %v1071, %v1070
        %v1090 = vpack.c.b16 %v1073, %v1072
        %v1091 = vpack.c.b16 %v1075, %v1074
        %1092 = vrot.lane.b32.xlu0 %v1076, 64
        %v1093 = vpop.permute.xlu0 %1092
        %1094 = vrot.lane.b32.xlu0 %v1077, 64
        %v1095 = vpop.permute.xlu0 %1094
        %1096 = vrot.lane.b32.xlu0 %v1078, 64
        %v1097 = vpop.permute.xlu0 %1096
        %1098 = vrot.lane.b32.xlu0 %v1079, 64
        %v1099 = vpop.permute.xlu0 %1098
        %1100 = vrot.lane.b32.xlu0 %v1080, 64
        %v1101 = vpop.permute.xlu0 %1100
        %1102 = vrot.lane.b32.xlu0 %v1081, 64
        %v1103 = vpop.permute.xlu0 %1102
        %1104 = vrot.lane.b32.xlu0 %v1082, 64
        %v1105 = vpop.permute.xlu0 %1104
        %1106 = vrot.lane.b32.xlu0 %v1083, 64
        %v1107 = vpop.permute.xlu0 %1106
        %1108 = vrot.lane.b32.xlu0 %v1084, 64
        %v1109 = vpop.permute.xlu0 %1108
        %1110 = vrot.lane.b32.xlu0 %v1085, 64
        %v1111 = vpop.permute.xlu0 %1110
        %1112 = vrot.lane.b32.xlu0 %v1086, 64
        %v1113 = vpop.permute.xlu0 %1112
        %1114 = vrot.lane.b32.xlu0 %v1087, 64
        %v1115 = vpop.permute.xlu0 %1114
        %1116 = vrot.lane.b32.xlu0 %v1088, 64
        %v1117 = vpop.permute.xlu0 %1116
        %1118 = vrot.lane.b32.xlu0 %v1089, 64
        %v1119 = vpop.permute.xlu0 %1118
        %1120 = vrot.lane.b32.xlu0 %v1090, 64
        %v1121 = vpop.permute.xlu0 %1120
        %1122 = vrot.lane.b32.xlu0 %v1091, 64
        %v1123 = vpop.permute.xlu0 %1122
        %v1124 = vunpack.c.l.b16 %v292
        %v1125 = vunpack.c.l.b16 %v293
        %v1126 = vpack.c.b16 %v1125, %v1124
        %1127 = vrot.lane.b32.xlu0 %v949, 96
        %v1128 = vpop.permute.xlu0 %1127
        %1129 = vrot.lane.b32.xlu0 %v950, 96
        %v1130 = vpop.permute.xlu0 %1129
        %1131 = vrot.lane.b32.xlu0 %v951, 96
        %v1132 = vpop.permute.xlu0 %1131
        %1133 = vrot.lane.b32.xlu0 %v952, 96
        %v1134 = vpop.permute.xlu0 %1133
        %1135 = vrot.lane.b32.xlu0 %v953, 96
        %v1136 = vpop.permute.xlu0 %1135
        %1137 = vrot.lane.b32.xlu0 %v954, 96
        %v1138 = vpop.permute.xlu0 %1137
        %1139 = vrot.lane.b32.xlu0 %v955, 96
        %v1140 = vpop.permute.xlu0 %1139
        %1141 = vrot.lane.b32.xlu0 %v956, 96
        %v1142 = vpop.permute.xlu0 %1141
        %1143 = vrot.lane.b32.xlu0 %v957, 96
        %v1144 = vpop.permute.xlu0 %1143
        %1145 = vrot.lane.b32.xlu0 %v958, 96
        %v1146 = vpop.permute.xlu0 %1145
        %1147 = vrot.lane.b32.xlu0 %v959, 96
        %v1148 = vpop.permute.xlu0 %1147
        %1149 = vrot.lane.b32.xlu0 %v960, 96
        %v1150 = vpop.permute.xlu0 %1149
        %1151 = vrot.lane.b32.xlu0 %v961, 96
        %v1152 = vpop.permute.xlu0 %1151
        %1153 = vrot.lane.b32.xlu0 %v962, 96
        %v1154 = vpop.permute.xlu0 %1153
        %1155 = vrot.lane.b32.xlu0 %v963, 96
        %v1156 = vpop.permute.xlu0 %1155
        %1157 = vrot.lane.b32.xlu0 %v1126, 96
        %v1158 = vpop.permute.xlu0 %1157
        %v1159 = vunpack.c.l.b16 %v861
        %v1160 = vunpack.c.l.b16 %v871
        %v1161 = vpack.c.b16 %v1160, %v1159
        %v1162 = vunpack.c.l.b16 %v878
        %v1163 = vunpack.c.l.b16 %v881
        %v1164 = vpack.c.b16 %v1163, %v1162
        %1165 = vrot.lane.b32.xlu0 %v1077, 32
        %v1166 = vpop.permute.xlu0 %1165
        %1167 = vrot.lane.b32.xlu0 %v1078, 32
        %v1168 = vpop.permute.xlu0 %1167
        %1169 = vrot.lane.b32.xlu0 %v1079, 32
        %v1170 = vpop.permute.xlu0 %1169
        %1171 = vrot.lane.b32.xlu0 %v1080, 32
        %v1172 = vpop.permute.xlu0 %1171
        %1173 = vrot.lane.b32.xlu0 %v1081, 32
        %v1174 = vpop.permute.xlu0 %1173
        %1175 = vrot.lane.b32.xlu0 %v1082, 32
        %v1176 = vpop.permute.xlu0 %1175
        %1177 = vrot.lane.b32.xlu0 %v1083, 32
        %v1178 = vpop.permute.xlu0 %1177
        %1179 = vrot.lane.b32.xlu0 %v1084, 32
        %v1180 = vpop.permute.xlu0 %1179
        %1181 = vrot.lane.b32.xlu0 %v1085, 32
        %v1182 = vpop.permute.xlu0 %1181
        %1183 = vrot.lane.b32.xlu0 %v1086, 32
        %v1184 = vpop.permute.xlu0 %1183
        %1185 = vrot.lane.b32.xlu0 %v1087, 32
        %v1186 = vpop.permute.xlu0 %1185
        %1187 = vrot.lane.b32.xlu0 %v1088, 32
        %v1188 = vpop.permute.xlu0 %1187
        %1189 = vrot.lane.b32.xlu0 %v1089, 32
        %v1190 = vpop.permute.xlu0 %1189
        %1191 = vrot.lane.b32.xlu0 %v1090, 32
        %v1192 = vpop.permute.xlu0 %1191
        %1193 = vrot.lane.b32.xlu0 %v1091, 32
        %v1194 = vpop.permute.xlu0 %1193
        %1195 = vrot.lane.b32.xlu0 %v1164, 32
        %v1196 = vpop.permute.xlu0 %1195
        %v1197 = vunpack.c.l.b16 %v295
        %v1198 = vunpack.c.l.b16 %v296
        %v1199 = vpack.c.b16 %v1198, %v1197
        %1200 = vrot.lane.b32.xlu0 %v950, 64
        %v1201 = vpop.permute.xlu0 %1200
        %1202 = vrot.lane.b32.xlu0 %v951, 64
        %v1203 = vpop.permute.xlu0 %1202
        %1204 = vrot.lane.b32.xlu0 %v952, 64
        %v1205 = vpop.permute.xlu0 %1204
        %1206 = vrot.lane.b32.xlu0 %v953, 64
        %v1207 = vpop.permute.xlu0 %1206
        %1208 = vrot.lane.b32.xlu0 %v954, 64
        %v1209 = vpop.permute.xlu0 %1208
        %1210 = vrot.lane.b32.xlu0 %v955, 64
        %v1211 = vpop.permute.xlu0 %1210
        %1212 = vrot.lane.b32.xlu0 %v956, 64
        %v1213 = vpop.permute.xlu0 %1212
        %1214 = vrot.lane.b32.xlu0 %v957, 64
        %v1215 = vpop.permute.xlu0 %1214
        %1216 = vrot.lane.b32.xlu0 %v958, 64
        %v1217 = vpop.permute.xlu0 %1216
        %1218 = vrot.lane.b32.xlu0 %v959, 64
        %v1219 = vpop.permute.xlu0 %1218
        %1220 = vrot.lane.b32.xlu0 %v960, 64
        %v1221 = vpop.permute.xlu0 %1220
        %1222 = vrot.lane.b32.xlu0 %v961, 64
        %v1223 = vpop.permute.xlu0 %1222
        %1224 = vrot.lane.b32.xlu0 %v962, 64
        %v1225 = vpop.permute.xlu0 %1224
        %1226 = vrot.lane.b32.xlu0 %v963, 64
        %v1227 = vpop.permute.xlu0 %1226
        %1228 = vrot.lane.b32.xlu0 %v1126, 64
        %v1229 = vpop.permute.xlu0 %1228
        %1230 = vrot.lane.b32.xlu0 %v1199, 64
        %v1231 = vpop.permute.xlu0 %1230
        %v1232 = vunpack.c.l.b16 %v895
        %v1233 = vunpack.c.l.b16 %v905
        %v1234 = vpack.c.b16 %v1233, %v1232
        %1235 = vrot.lane.b32.xlu0 %v998, 96
        %v1236 = vpop.permute.xlu0 %1235
        %1237 = vrot.lane.b32.xlu0 %v999, 96
        %v1238 = vpop.permute.xlu0 %1237
        %1239 = vrot.lane.b32.xlu0 %v1000, 96
        %v1240 = vpop.permute.xlu0 %1239
        %1241 = vrot.lane.b32.xlu0 %v1001, 96
        %v1242 = vpop.permute.xlu0 %1241
        %1243 = vrot.lane.b32.xlu0 %v1002, 96
        %v1244 = vpop.permute.xlu0 %1243
        %1245 = vrot.lane.b32.xlu0 %v1003, 96
        %v1246 = vpop.permute.xlu0 %1245
        %1247 = vrot.lane.b32.xlu0 %v1004, 96
        %v1248 = vpop.permute.xlu0 %1247
        %1249 = vrot.lane.b32.xlu0 %v1005, 96
        %v1250 = vpop.permute.xlu0 %1249
        %1251 = vrot.lane.b32.xlu0 %v1006, 96
        %v1252 = vpop.permute.xlu0 %1251
        %1253 = vrot.lane.b32.xlu0 %v1007, 96
        %v1254 = vpop.permute.xlu0 %1253
        %1255 = vrot.lane.b32.xlu0 %v1008, 96
        %v1256 = vpop.permute.xlu0 %1255
        %1257 = vrot.lane.b32.xlu0 %v1009, 96
        %v1258 = vpop.permute.xlu0 %1257
        %1259 = vrot.lane.b32.xlu0 %v1010, 96
        %v1260 = vpop.permute.xlu0 %1259
        %1261 = vrot.lane.b32.xlu0 %v1011, 96
        %v1262 = vpop.permute.xlu0 %1261
        %1263 = vrot.lane.b32.xlu0 %v1161, 96
        %v1264 = vpop.permute.xlu0 %1263
        %1265 = vrot.lane.b32.xlu0 %v1234, 96
        %v1266 = vpop.permute.xlu0 %1265
        %v1267 = vunpack.c.l.b16 %v912
        %v1268 = vunpack.c.l.b16 %v915
        %v1269 = vpack.c.b16 %v1268, %v1267
        %vm1270 = vcmask 261120
        %v1273 = vsel %vm1270, %v948, %v1013
        %v1276 = vsel %vm1270, %v949, %v1015
        %v1279 = vsel %vm1270, %v950, %v1017
        %v1282 = vsel %vm1270, %v951, %v1019
        %v1285 = vsel %vm1270, %v952, %v1021
        %v1288 = vsel %vm1270, %v953, %v1023
        %v1291 = vsel %vm1270, %v954, %v1025
        %v1294 = vsel %vm1270, %v955, %v1027
        %v1297 = vsel %vm1270, %v956, %v1029
        %v1300 = vsel %vm1270, %v957, %v1031
        %v1303 = vsel %vm1270, %v958, %v1033
        %v1306 = vsel %vm1270, %v959, %v1035
        %v1309 = vsel %vm1270, %v960, %v1037
        %v1312 = vsel %vm1270, %v961, %v1039
        %v1315 = vsel %vm1270, %v962, %v1041
        %v1318 = vsel %vm1270, %v963, %v1043
        %vm1319 = vcmask 523264
        %v1321 = vsel %vm1319, %v1273, %v1093
        %v1323 = vsel %vm1319, %v1276, %v1095
        %v1325 = vsel %vm1319, %v1279, %v1097
        %v1327 = vsel %vm1319, %v1282, %v1099
        %v1329 = vsel %vm1319, %v1285, %v1101
        %v1331 = vsel %vm1319, %v1288, %v1103
        %v1333 = vsel %vm1319, %v1291, %v1105
        %v1335 = vsel %vm1319, %v1294, %v1107
        %v1337 = vsel %vm1319, %v1297, %v1109
        %v1339 = vsel %vm1319, %v1300, %v1111
        %v1341 = vsel %vm1319, %v1303, %v1113
        %v1343 = vsel %vm1319, %v1306, %v1115
        %v1345 = vsel %vm1319, %v1309, %v1117
        %v1347 = vsel %vm1319, %v1312, %v1119
        %v1349 = vsel %vm1319, %v1315, %v1121
        %v1351 = vsel %vm1319, %v1318, %v1123
        %vm1352 = vcmask 785408
        %v1354 = vsel %vm1352, %v1321, %v1128
        %v1357 = vsel %vm1352, %v1323, %v1130
        %v1360 = vsel %vm1352, %v1325, %v1132
        %v1363 = vsel %vm1352, %v1327, %v1134
        %v1366 = vsel %vm1352, %v1329, %v1136
        %v1369 = vsel %vm1352, %v1331, %v1138
        %v1372 = vsel %vm1352, %v1333, %v1140
        %v1375 = vsel %vm1352, %v1335, %v1142
        %v1378 = vsel %vm1352, %v1337, %v1144
        %v1381 = vsel %vm1352, %v1339, %v1146
        %v1384 = vsel %vm1352, %v1341, %v1148
        %v1387 = vsel %vm1352, %v1343, %v1150
        %v1390 = vsel %vm1352, %v1345, %v1152
        %v1393 = vsel %vm1352, %v1347, %v1154
        %v1396 = vsel %vm1352, %v1349, %v1156
        %v1399 = vsel %vm1352, %v1351, %v1158
        %v1403 = vsel %vm1270, %v997, %v1166
        %v1406 = vsel %vm1270, %v998, %v1168
        %v1409 = vsel %vm1270, %v999, %v1170
        %v1412 = vsel %vm1270, %v1000, %v1172
        %v1415 = vsel %vm1270, %v1001, %v1174
        %v1418 = vsel %vm1270, %v1002, %v1176
        %v1421 = vsel %vm1270, %v1003, %v1178
        %v1424 = vsel %vm1270, %v1004, %v1180
        %v1427 = vsel %vm1270, %v1005, %v1182
        %v1430 = vsel %vm1270, %v1006, %v1184
        %v1433 = vsel %vm1270, %v1007, %v1186
        %v1436 = vsel %vm1270, %v1008, %v1188
        %v1439 = vsel %vm1270, %v1009, %v1190
        %v1442 = vsel %vm1270, %v1010, %v1192
        %v1445 = vsel %vm1270, %v1011, %v1194
        %v1448 = vsel %vm1270, %v1161, %v1196
        %v1450 = vsel %vm1319, %v1403, %v1201
        %v1452 = vsel %vm1319, %v1406, %v1203
        %v1454 = vsel %vm1319, %v1409, %v1205
        %v1456 = vsel %vm1319, %v1412, %v1207
        %v1458 = vsel %vm1319, %v1415, %v1209
        %v1460 = vsel %vm1319, %v1418, %v1211
        %v1462 = vsel %vm1319, %v1421, %v1213
        %v1464 = vsel %vm1319, %v1424, %v1215
        %v1466 = vsel %vm1319, %v1427, %v1217
        %v1468 = vsel %vm1319, %v1430, %v1219
        %v1470 = vsel %vm1319, %v1433, %v1221
        %v1472 = vsel %vm1319, %v1436, %v1223
        %v1474 = vsel %vm1319, %v1439, %v1225
        %v1476 = vsel %vm1319, %v1442, %v1227
        %v1478 = vsel %vm1319, %v1445, %v1229
        %v1480 = vsel %vm1319, %v1448, %v1231
        %v1482 = vsel %vm1352, %v1450, %v1236
        %v1485 = vsel %vm1352, %v1452, %v1238
        %v1488 = vsel %vm1352, %v1454, %v1240
        %v1491 = vsel %vm1352, %v1456, %v1242
        %v1494 = vsel %vm1352, %v1458, %v1244
        %v1497 = vsel %vm1352, %v1460, %v1246
        %v1500 = vsel %vm1352, %v1462, %v1248
        %v1503 = vsel %vm1352, %v1464, %v1250
        %v1506 = vsel %vm1352, %v1466, %v1252
        %v1509 = vsel %vm1352, %v1468, %v1254
        %v1512 = vsel %vm1352, %v1470, %v1256
        %v1515 = vsel %vm1352, %v1472, %v1258
        %v1518 = vsel %vm1352, %v1474, %v1260
        %v1521 = vsel %vm1352, %v1476, %v1262
        %v1524 = vsel %vm1352, %v1478, %v1264
        %v1527 = vsel %vm1352, %v1480, %v1266
        %v1529 = vld [vmem:[%s1] sm:$0xf]
        %v1530 = vld [vmem:[%s1 + $0x4] sm:$0xf]
        %v1531 = vld [vmem:[%s1 + $0x8] sm:$0xf]
        %v1532 = vld [vmem:[%s1 + $0xc] sm:$0xf]
        %v1533 = vld [vmem:[%s1 + $0x10] sm:$0xf]
        %v1534 = vld [vmem:[%s1 + $0x14] sm:$0xf]
        %v1535 = vld [vmem:[%s1 + $0x18] sm:$0xf]
        %v1536 = vld [vmem:[%s1 + $0x1c] sm:$0xf]
        %v1537 = vld [vmem:[%s1 + $0x20] sm:$0xf]
        %v1538 = vld [vmem:[%s1 + $0x24] sm:$0xf]
        %v1539 = vld [vmem:[%s1 + $0x28] sm:$0xf]
        %v1540 = vld [vmem:[%s1 + $0x2c] sm:$0xf]
        %v1541 = vld [vmem:[%s1 + $0x30] sm:$0xf]
        %v1542 = vld [vmem:[%s1 + $0x34] sm:$0xf]
        %v1543 = vld [vmem:[%s1 + $0x38] sm:$0xf]
        %v1544 = vld [vmem:[%s1 + $0x3c] sm:$0xf]
        %v1545 = vld [vmem:[%s1 + $0x40] sm:$0xf]
        %v1546 = vld [vmem:[%s1 + $0x44] sm:$0xf]
        %v1547 = vld [vmem:[%s1 + $0x48] sm:$0xf]
        %v1548 = vld [vmem:[%s1 + $0x4c] sm:$0xf]
        %v1549 = vld [vmem:[%s1 + $0x50] sm:$0xf]
        %v1550 = vld [vmem:[%s1 + $0x54] sm:$0xf]
        %v1551 = vld [vmem:[%s1 + $0x58] sm:$0xf]
        %v1552 = vld [vmem:[%s1 + $0x5c] sm:$0xf]
        %v1553 = vld [vmem:[%s1 + $0x60] sm:$0xf]
        %v1554 = vld [vmem:[%s1 + $0x64] sm:$0xf]
        %v1555 = vld [vmem:[%s1 + $0x68] sm:$0xf]
        %v1556 = vld [vmem:[%s1 + $0x6c] sm:$0xf]
        %v1557 = vld [vmem:[%s1 + $0x70] sm:$0xf]
        %v1558 = vld [vmem:[%s1 + $0x74] sm:$0xf]
        %v1559 = vld [vmem:[%s1 + $0x78] sm:$0xf]
        %v1560 = vld [vmem:[%s1 + $0x7c] sm:$0xf]
        %v1561 = vld [vmem:[%s1 + $0x80] sm:$0xf]
        %v1562 = vld [vmem:[%s1 + $0x84] sm:$0xf]
        %v1563 = vld [vmem:[%s1 + $0x88] sm:$0xf]
        %v1564 = vld [vmem:[%s1 + $0x8c] sm:$0xf]
        %v1565 = vld [vmem:[%s242] sm:$0xf]
        %v1566 = vld [vmem:[%s242 + $0x4] sm:$0x1]
        %v1567 = vld [vmem:[%s242 + $0x8] sm:$0xf]
        %v1568 = vld [vmem:[%s242 + $0xc] sm:$0x1]
        %v1569 = vld [vmem:[%s242 + $0x10] sm:$0xf]
        %v1570 = vld [vmem:[%s242 + $0x14] sm:$0x1]
        %v1571 = vld [vmem:[%s242 + $0x18] sm:$0xf]
        %v1572 = vld [vmem:[%s242 + $0x1c] sm:$0x1]
        %v1573 = vld [vmem:[%s242 + $0x20] sm:$0xf]
        %v1574 = vld [vmem:[%s242 + $0x24] sm:$0x1]
        %v1575 = vld [vmem:[%s242 + $0x28] sm:$0xf]
        %v1576 = vld [vmem:[%s242 + $0x2c] sm:$0x1]
        %v1577 = vld [vmem:[%s242 + $0x30] sm:$0xf]
        %v1578 = vld [vmem:[%s242 + $0x34] sm:$0x1]
        %v1579 = vld [vmem:[%s242 + $0x38] sm:$0xf]
        %v1580 = vld [vmem:[%s242 + $0x3c] sm:$0x1]
        %v1581 = vld [vmem:[%s242 + $0x40] sm:$0xf]
        %v1582 = vld [vmem:[%s242 + $0x44] sm:$0x1]
        %v1583 = vld [vmem:[%s242 + $0x48] sm:$0xf]
        %v1584 = vld [vmem:[%s242 + $0x4c] sm:$0x1]
        %v1586 = vshrl.u32 %v1565, 16
        %v1588 = vrot.slane %v1586, 4
        %v1589 = vshll.u32 %v1565, 16
        %v1591 = vrot.slane %v1589, 5
        %v1592 = vor.u32 %v1588, %v1591
        %v1593 = vrot.slane %v1592, 4
        %v1595 = vshll.u32 %v1566, 16
        %v1597 = vrot.slane %v1595, 5
        %v1598 = vsel %vm300, %v1593, %v1597
        %v1600 = vshrl.u32 %v1567, 16
        %v1602 = vrot.slane %v1600, 4
        %v1603 = vshll.u32 %v1567, 16
        %v1605 = vrot.slane %v1603, 5
        %v1606 = vor.u32 %v1602, %v1605
        %v1607 = vrot.slane %v1606, 4
        %v1609 = vshll.u32 %v1568, 16
        %v1611 = vrot.slane %v1609, 5
        %v1612 = vsel %vm300, %v1607, %v1611
        %v1614 = vshrl.u32 %v1569, 16
        %v1616 = vrot.slane %v1614, 4
        %v1617 = vshll.u32 %v1569, 16
        %v1619 = vrot.slane %v1617, 5
        %v1620 = vor.u32 %v1616, %v1619
        %v1621 = vrot.slane %v1620, 4
        %v1623 = vshll.u32 %v1570, 16
        %v1625 = vrot.slane %v1623, 5
        %v1626 = vsel %vm300, %v1621, %v1625
        %v1628 = vshrl.u32 %v1571, 16
        %v1630 = vrot.slane %v1628, 4
        %v1631 = vshll.u32 %v1571, 16
        %v1633 = vrot.slane %v1631, 5
        %v1634 = vor.u32 %v1630, %v1633
        %v1635 = vrot.slane %v1634, 4
        %v1637 = vshll.u32 %v1572, 16
        %v1639 = vrot.slane %v1637, 5
        %v1640 = vsel %vm300, %v1635, %v1639
        %v1642 = vshrl.u32 %v1573, 16
        %v1644 = vrot.slane %v1642, 4
        %v1645 = vshll.u32 %v1573, 16
        %v1647 = vrot.slane %v1645, 5
        %v1648 = vor.u32 %v1644, %v1647
        %v1649 = vrot.slane %v1648, 4
        %v1651 = vshll.u32 %v1574, 16
        %v1653 = vrot.slane %v1651, 5
        %v1654 = vsel %vm300, %v1649, %v1653
        %v1656 = vshrl.u32 %v1575, 16
        %v1658 = vrot.slane %v1656, 4
        %v1659 = vshll.u32 %v1575, 16
        %v1661 = vrot.slane %v1659, 5
        %v1662 = vor.u32 %v1658, %v1661
        %v1663 = vrot.slane %v1662, 4
        %v1665 = vshll.u32 %v1576, 16
        %v1667 = vrot.slane %v1665, 5
        %v1668 = vsel %vm300, %v1663, %v1667
        %v1670 = vshrl.u32 %v1577, 16
        %v1672 = vrot.slane %v1670, 4
        %v1673 = vshll.u32 %v1577, 16
        %v1675 = vrot.slane %v1673, 5
        %v1676 = vor.u32 %v1672, %v1675
        %v1677 = vrot.slane %v1676, 4
        %v1679 = vshll.u32 %v1578, 16
        %v1681 = vrot.slane %v1679, 5
        %v1682 = vsel %vm300, %v1677, %v1681
        %v1684 = vshrl.u32 %v1579, 16
        %v1686 = vrot.slane %v1684, 4
        %v1687 = vshll.u32 %v1579, 16
        %v1689 = vrot.slane %v1687, 5
        %v1690 = vor.u32 %v1686, %v1689
        %v1691 = vrot.slane %v1690, 4
        %v1693 = vshll.u32 %v1580, 16
        %v1695 = vrot.slane %v1693, 5
        %v1696 = vsel %vm300, %v1691, %v1695
        %v1713 = vrot.slane %v1565, 5
        %v1714 = vrot.slane %v1713, 4
        %v1715 = vrot.slane %v1566, 5
        %v1716 = vsel %vm735, %v1714, %v1715
        %v1717 = vrot.slane %v1567, 5
        %v1718 = vrot.slane %v1717, 4
        %v1719 = vrot.slane %v1568, 5
        %v1720 = vsel %vm735, %v1718, %v1719
        %v1721 = vrot.slane %v1569, 5
        %v1722 = vrot.slane %v1721, 4
        %v1723 = vrot.slane %v1570, 5
        %v1724 = vsel %vm735, %v1722, %v1723
        %v1725 = vrot.slane %v1571, 5
        %v1726 = vrot.slane %v1725, 4
        %v1727 = vrot.slane %v1572, 5
        %v1728 = vsel %vm735, %v1726, %v1727
        %v1729 = vrot.slane %v1573, 5
        %v1730 = vrot.slane %v1729, 4
        %v1731 = vrot.slane %v1574, 5
        %v1732 = vsel %vm735, %v1730, %v1731
        %v1733 = vrot.slane %v1575, 5
        %v1734 = vrot.slane %v1733, 4
        %v1735 = vrot.slane %v1576, 5
        %v1736 = vsel %vm735, %v1734, %v1735
        %v1737 = vrot.slane %v1577, 5
        %v1738 = vrot.slane %v1737, 4
        %v1739 = vrot.slane %v1578, 5
        %v1740 = vsel %vm735, %v1738, %v1739
        %v1741 = vrot.slane %v1579, 5
        %v1742 = vrot.slane %v1741, 4
        %v1743 = vrot.slane %v1580, 5
        %v1744 = vsel %vm735, %v1742, %v1743
        %v1746 = vshrl.u32 %v1581, 16
        %v1748 = vrot.slane %v1746, 4
        %v1749 = vshll.u32 %v1581, 16
        %v1751 = vrot.slane %v1749, 5
        %v1752 = vor.u32 %v1748, %v1751
        %v1753 = vrot.slane %v1752, 4
        %v1755 = vshll.u32 %v1582, 16
        %v1757 = vrot.slane %v1755, 5
        %v1758 = vsel %vm300, %v1753, %v1757
        %v1761 = vrot.slane %v1581, 5
        %v1762 = vrot.slane %v1761, 4
        %v1763 = vrot.slane %v1582, 5
        %v1764 = vsel %vm735, %v1762, %v1763
        %v1766 = vshrl.u32 %v1583, 16
        %v1768 = vrot.slane %v1766, 4
        %v1769 = vshll.u32 %v1583, 16
        %v1771 = vrot.slane %v1769, 5
        %v1772 = vor.u32 %v1768, %v1771
        %v1773 = vrot.slane %v1772, 4
        %v1775 = vshll.u32 %v1584, 16
        %v1777 = vrot.slane %v1775, 5
        %v1778 = vsel %vm300, %v1773, %v1777
        %v1781 = vrot.slane %v1583, 5
        %v1782 = vrot.slane %v1781, 4
        %v1783 = vrot.slane %v1584, 5
        %v1784 = vsel %vm735, %v1782, %v1783
        %v1785 = vunpack.c.l.b16 %v1565
        %v1786 = vunpack.c.l.b16 %v1567
        %v1787 = vunpack.c.l.b16 %v1569
        %v1788 = vunpack.c.l.b16 %v1571
        %v1789 = vunpack.c.l.b16 %v1573
        %v1790 = vunpack.c.l.b16 %v1575
        %v1791 = vunpack.c.l.b16 %v1577
        %v1792 = vunpack.c.l.b16 %v1579
        %v1793 = vpack.c.b16 %v1786, %v1785
        %v1794 = vpack.c.b16 %v1788, %v1787
        %v1795 = vpack.c.b16 %v1790, %v1789
        %v1796 = vpack.c.b16 %v1792, %v1791
        %v1797 = vunpack.c.l.b16 %v1598
        %v1798 = vunpack.c.l.b16 %v1612
        %v1799 = vunpack.c.l.b16 %v1626
        %v1800 = vunpack.c.l.b16 %v1640
        %v1801 = vunpack.c.l.b16 %v1654
        %v1802 = vunpack.c.l.b16 %v1668
        %v1803 = vunpack.c.l.b16 %v1682
        %v1804 = vunpack.c.l.b16 %v1696
        %v1805 = vpack.c.b16 %v1798, %v1797
        %v1806 = vpack.c.b16 %v1800, %v1799
        %v1807 = vpack.c.b16 %v1802, %v1801
        %v1808 = vpack.c.b16 %v1804, %v1803
        %1809 = vrot.lane.b32.xlu0 %v1805, 64
        %v1810 = vpop.permute.xlu0 %1809
        %1811 = vrot.lane.b32.xlu0 %v1806, 64
        %v1812 = vpop.permute.xlu0 %1811
        %1813 = vrot.lane.b32.xlu0 %v1807, 64
        %v1814 = vpop.permute.xlu0 %1813
        %1815 = vrot.lane.b32.xlu0 %v1808, 64
        %v1816 = vpop.permute.xlu0 %1815
        %v1817 = vunpack.c.l.b16 %v1716
        %v1818 = vunpack.c.l.b16 %v1720
        %v1819 = vunpack.c.l.b16 %v1724
        %v1820 = vunpack.c.l.b16 %v1728
        %v1821 = vunpack.c.l.b16 %v1732
        %v1822 = vunpack.c.l.b16 %v1736
        %v1823 = vunpack.c.l.b16 %v1740
        %v1824 = vunpack.c.l.b16 %v1744
        %v1825 = vpack.c.b16 %v1818, %v1817
        %v1826 = vpack.c.b16 %v1820, %v1819
        %v1827 = vpack.c.b16 %v1822, %v1821
        %v1828 = vpack.c.b16 %v1824, %v1823
        %v1829 = vunpack.c.l.b16 %v1581
        %v1830 = vpack.c.b16 %v1787, %v1786
        %v1831 = vpack.c.b16 %v1789, %v1788
        %v1832 = vpack.c.b16 %v1791, %v1790
        %v1833 = vpack.c.b16 %v1829, %v1792
        %1834 = vrot.lane.b32.xlu0 %v1830, 64
        %v1835 = vpop.permute.xlu0 %1834
        %1836 = vrot.lane.b32.xlu0 %v1831, 64
        %v1837 = vpop.permute.xlu0 %1836
        %1838 = vrot.lane.b32.xlu0 %v1832, 64
        %v1839 = vpop.permute.xlu0 %1838
        %1840 = vrot.lane.b32.xlu0 %v1833, 64
        %v1841 = vpop.permute.xlu0 %1840
        %v1842 = vunpack.c.l.b16 %v1758
        %v1843 = vpack.c.b16 %v1799, %v1798
        %v1844 = vpack.c.b16 %v1801, %v1800
        %v1845 = vpack.c.b16 %v1803, %v1802
        %v1846 = vpack.c.b16 %v1842, %v1804
        %v1847 = vunpack.c.l.b16 %v1764
        %v1848 = vpack.c.b16 %v1819, %v1818
        %v1849 = vpack.c.b16 %v1821, %v1820
        %v1850 = vpack.c.b16 %v1823, %v1822
        %v1851 = vpack.c.b16 %v1847, %v1824
        %1852 = vrot.lane.b32.xlu0 %v1848, 64
        %v1853 = vpop.permute.xlu0 %1852
        %1854 = vrot.lane.b32.xlu0 %v1849, 64
        %v1855 = vpop.permute.xlu0 %1854
        %1856 = vrot.lane.b32.xlu0 %v1850, 64
        %v1857 = vpop.permute.xlu0 %1856
        %1858 = vrot.lane.b32.xlu0 %v1851, 64
        %v1859 = vpop.permute.xlu0 %1858
        %v1860 = vunpack.c.l.b16 %v1583
        %v1861 = vpack.c.b16 %v1860, %v1829
        %v1862 = vunpack.c.l.b16 %v1778
        %v1863 = vpack.c.b16 %v1862, %v1842
        %1864 = vrot.lane.b32.xlu0 %v1863, 64
        %v1865 = vpop.permute.xlu0 %1864
        %v1866 = vunpack.c.l.b16 %v1784
        %v1867 = vpack.c.b16 %v1866, %v1847
        %v1870 = vsel %vm1319, %v1793, %v1810
        %v1874 = vsel %vm1319, %v1794, %v1812
        %v1878 = vsel %vm1319, %v1795, %v1814
        %v1882 = vsel %vm1319, %v1796, %v1816
        %v1886 = vsel %vm1319, %v1825, %v1835
        %v1890 = vsel %vm1319, %v1826, %v1837
        %v1894 = vsel %vm1319, %v1827, %v1839
        %v1898 = vsel %vm1319, %v1828, %v1841
        %v1902 = vsel %vm1319, %v1843, %v1853
        %v1906 = vsel %vm1319, %v1844, %v1855
        %v1910 = vsel %vm1319, %v1845, %v1857
        %v1914 = vsel %vm1319, %v1846, %v1859
        %v1918 = vsel %vm1319, %v1861, %v1865
        %v1920 = vld [vmem:[%s3] sm:$0xf]
        %v1921 = vld [vmem:[%s3 + $0x4] sm:$0xf]
        %v1922 = vld [vmem:[%s3 + $0x8] sm:$0xf]
        %v1923 = vld [vmem:[%s3 + $0xc] sm:$0xf]
        %v1924 = vld [vmem:[%s3 + $0x10] sm:$0xf]
        %v1925 = vld [vmem:[%s3 + $0x14] sm:$0xf]
        %v1926 = vld [vmem:[%s3 + $0x18] sm:$0xf]
        %v1927 = vld [vmem:[%s3 + $0x1c] sm:$0xf]
        %v1928 = vld [vmem:[%s3 + $0x20] sm:$0xf]
        %v1929 = vld [vmem:[%s3 + $0x24] sm:$0xf]
        %v1930 = vld [vmem:[%s3 + $0x28] sm:$0xf]
        %v1931 = vld [vmem:[%s3 + $0x2c] sm:$0xf]
        %v1932 = vld [vmem:[%s3 + $0x30] sm:$0xf]
        %v1933 = vld [vmem:[%s3 + $0x34] sm:$0xf]
        %v1934 = vld [vmem:[%s3 + $0x38] sm:$0xf]
        %v1935 = vld [vmem:[%s3 + $0x3c] sm:$0xf]
        %v1936 = vld [vmem:[%s3 + $0x40] sm:$0xf]
        %v1937 = vld [vmem:[%s3 + $0x44] sm:$0xf]
        %v1938 = vld [vmem:[%s3 + $0x48] sm:$0xf]
        %v1939 = vld [vmem:[%s3 + $0x4c] sm:$0xf]
        %v1940 = vld [vmem:[%s3 + $0x50] sm:$0xf]
        %v1941 = vld [vmem:[%s3 + $0x54] sm:$0xf]
        %v1942 = vld [vmem:[%s3 + $0x58] sm:$0xf]
        %v1943 = vld [vmem:[%s3 + $0x5c] sm:$0xf]
        %v1944 = vld [vmem:[%s3 + $0x60] sm:$0xf]
        %v1945 = vld [vmem:[%s3 + $0x64] sm:$0xf]
        %v1946 = vld [vmem:[%s3 + $0x68] sm:$0xf]
        %v1947 = vld [vmem:[%s3 + $0x6c] sm:$0xf]
        %v1948 = vld [vmem:[%s3 + $0x70] sm:$0xf]
        %v1949 = vld [vmem:[%s3 + $0x74] sm:$0xf]
        %v1950 = vld [vmem:[%s3 + $0x78] sm:$0xf]
        %v1951 = vld [vmem:[%s3 + $0x7c] sm:$0xf]
        %v1952 = vld [vmem:[%s3 + $0x80] sm:$0xf]
        %v1953 = vld [vmem:[%s3 + $0x84] sm:$0xf]
        %v1954 = vld [vmem:[%s3 + $0x88] sm:$0xf]
        %v1955 = vld [vmem:[%s3 + $0x8c] sm:$0xf]
        %v1956 = vld [vmem:[%s3 + $0x90] sm:$0xf]
        %v1957 = vld [vmem:[%s3 + $0x94] sm:$0xf]
        %v1958 = vld [vmem:[%s3 + $0x98] sm:$0xf]
        %v1959 = vld [vmem:[%s3 + $0x9c] sm:$0xf]
        %v1960 = vld [vmem:[%s3 + $0xa0] sm:$0xf]
        %v1961 = vld [vmem:[%s3 + $0xa4] sm:$0xf]
        %v1962 = vld [vmem:[%s3 + $0xa8] sm:$0xf]
        %v1963 = vld [vmem:[%s3 + $0xac] sm:$0xf]
        %v1964 = vld [vmem:[%s3 + $0xb0] sm:$0xf]
        %v1965 = vld [vmem:[%s3 + $0xb4] sm:$0xf]
        %v1966 = vld [vmem:[%s3 + $0xb8] sm:$0xf]
        %v1967 = vld [vmem:[%s3 + $0xbc] sm:$0xf]
        %v1968 = vld [vmem:[%s3 + $0xc0] sm:$0xf]
        %v1969 = vld [vmem:[%s3 + $0xc4] sm:$0xf]
        %v1970 = vld [vmem:[%s3 + $0xc8] sm:$0xf]
        %v1971 = vld [vmem:[%s3 + $0xcc] sm:$0xf]
        %v1972 = vld [vmem:[%s3 + $0xd0] sm:$0xf]
        %v1973 = vld [vmem:[%s3 + $0xd4] sm:$0xf]
        %v1974 = vld [vmem:[%s3 + $0xd8] sm:$0xf]
        %v1975 = vld [vmem:[%s3 + $0xdc] sm:$0xf]
        %v1976 = vld [vmem:[%s3 + $0xe0] sm:$0xf]
        %v1977 = vld [vmem:[%s3 + $0xe4] sm:$0xf]
        %v1978 = vld [vmem:[%s3 + $0xe8] sm:$0xf]
        %v1979 = vld [vmem:[%s3 + $0xec] sm:$0xf]
        %v1980 = vld [vmem:[%s3 + $0xf0] sm:$0xf]
        %v1981 = vld [vmem:[%s3 + $0xf4] sm:$0xf]
        %v1982 = vld [vmem:[%s3 + $0xf8] sm:$0xf]
        %v1983 = vld [vmem:[%s3 + $0xfc] sm:$0xf]
        %v1984 = vld [vmem:[%s3 + $0x100] sm:$0xf]
        %v1985 = vld [vmem:[%s3 + $0x104] sm:$0xf]
        %v1986 = vld [vmem:[%s3 + $0x108] sm:$0xf]
        %v1987 = vld [vmem:[%s3 + $0x10c] sm:$0xf]
        %v1988 = vld [vmem:[%s3 + $0x110] sm:$0xf]
        %v1989 = vld [vmem:[%s3 + $0x114] sm:$0xf]
        %v1990 = vld [vmem:[%s3 + $0x118] sm:$0xf]
        %v1991 = vld [vmem:[%s3 + $0x11c] sm:$0xf]
        %v2064 = vunpack.c.l.b16 %v1920
        %v2065 = vunpack.c.l.b16 %v1921
        %v2066 = vunpack.c.l.b16 %v1922
        %v2067 = vunpack.c.l.b16 %v1923
        %v2068 = vunpack.c.l.b16 %v1924
        %v2069 = vunpack.c.l.b16 %v1925
        %v2070 = vunpack.c.l.b16 %v1926
        %v2071 = vunpack.c.l.b16 %v1927
        %v2072 = vunpack.c.l.b16 %v1928
        %v2073 = vunpack.c.l.b16 %v1929
        %v2074 = vunpack.c.l.b16 %v1930
        %v2075 = vunpack.c.l.b16 %v1931
        %v2076 = vunpack.c.l.b16 %v1932
        %v2077 = vunpack.c.l.b16 %v1933
        %v2078 = vunpack.c.l.b16 %v1934
        %v2079 = vunpack.c.l.b16 %v1935
        %v2080 = vunpack.c.l.b16 %v1936
        %v2081 = vunpack.c.l.b16 %v1937
        %v2082 = vunpack.c.l.b16 %v1938
        %v2083 = vunpack.c.l.b16 %v1939
        %v2084 = vunpack.c.l.b16 %v1940
        %v2085 = vunpack.c.l.b16 %v1941
        %v2086 = vunpack.c.l.b16 %v1942
        %v2087 = vunpack.c.l.b16 %v1943
        %v2088 = vunpack.c.l.b16 %v1944
        %v2089 = vunpack.c.l.b16 %v1945
        %v2090 = vunpack.c.l.b16 %v1946
        %v2091 = vunpack.c.l.b16 %v1947
        %v2092 = vunpack.c.l.b16 %v1948
        %v2093 = vunpack.c.l.b16 %v1949
        %v2094 = vunpack.c.l.b16 %v1950
        %v2095 = vunpack.c.l.b16 %v1951
        %v2096 = vunpack.c.l.b16 %v1952
        %v2097 = vunpack.c.l.b16 %v1953
        %v2098 = vunpack.c.l.b16 %v1954
        %v2099 = vunpack.c.l.b16 %v1955
        %v2100 = vunpack.c.l.b16 %v1956
        %v2101 = vunpack.c.l.b16 %v1957
        %v2102 = vunpack.c.l.b16 %v1958
        %v2103 = vunpack.c.l.b16 %v1959
        %v2104 = vunpack.c.l.b16 %v1960
        %v2105 = vunpack.c.l.b16 %v1961
        %v2106 = vunpack.c.l.b16 %v1962
        %v2107 = vunpack.c.l.b16 %v1963
        %v2108 = vunpack.c.l.b16 %v1964
        %v2109 = vunpack.c.l.b16 %v1965
        %v2110 = vunpack.c.l.b16 %v1966
        %v2111 = vunpack.c.l.b16 %v1967
        %v2112 = vunpack.c.l.b16 %v1968
        %v2113 = vunpack.c.l.b16 %v1969
        %v2114 = vunpack.c.l.b16 %v1970
        %v2115 = vunpack.c.l.b16 %v1971
        %v2116 = vunpack.c.l.b16 %v1972
        %v2117 = vunpack.c.l.b16 %v1973
        %v2118 = vunpack.c.l.b16 %v1974
        %v2119 = vunpack.c.l.b16 %v1975
        %v2120 = vunpack.c.l.b16 %v1976
        %v2121 = vunpack.c.l.b16 %v1977
        %v2122 = vunpack.c.l.b16 %v1978
        %v2123 = vunpack.c.l.b16 %v1979
        %v2124 = vunpack.c.l.b16 %v1980
        %v2125 = vunpack.c.l.b16 %v1981
        %v2126 = vunpack.c.l.b16 %v1982
        %v2127 = vunpack.c.l.b16 %v1983
        %v2128 = vunpack.c.l.b16 %v1984
        %v2129 = vunpack.c.l.b16 %v1985
        %v2130 = vunpack.c.l.b16 %v1986
        %v2131 = vunpack.c.l.b16 %v1987
        %v2132 = vunpack.c.l.b16 %v1988
        %v2133 = vunpack.c.l.b16 %v1989
        %v2134 = vunpack.c.l.b16 %v1990
        %v2135 = vunpack.c.l.b16 %v1991
        %v2136 = vpack.c.b16 %v2065, %v2064
        %v2137 = vpack.c.b16 %v2067, %v2066
        %v2138 = vpack.c.b16 %v2069, %v2068
        %v2139 = vpack.c.b16 %v2071, %v2070
        %v2140 = vpack.c.b16 %v2073, %v2072
        %v2141 = vpack.c.b16 %v2075, %v2074
        %v2142 = vpack.c.b16 %v2077, %v2076
        %v2143 = vpack.c.b16 %v2079, %v2078
        %v2144 = vpack.c.b16 %v2081, %v2080
        %v2145 = vpack.c.b16 %v2083, %v2082
        %v2146 = vpack.c.b16 %v2085, %v2084
        %v2147 = vpack.c.b16 %v2087, %v2086
        %v2148 = vpack.c.b16 %v2089, %v2088
        %v2149 = vpack.c.b16 %v2091, %v2090
        %v2150 = vpack.c.b16 %v2093, %v2092
        %v2151 = vpack.c.b16 %v2095, %v2094
        %v2152 = vpack.c.b16 %v2097, %v2096
        %v2153 = vpack.c.b16 %v2099, %v2098
        %v2154 = vpack.c.b16 %v2101, %v2100
        %v2155 = vpack.c.b16 %v2103, %v2102
        %v2156 = vpack.c.b16 %v2105, %v2104
        %v2157 = vpack.c.b16 %v2107, %v2106
        %v2158 = vpack.c.b16 %v2109, %v2108
        %v2159 = vpack.c.b16 %v2111, %v2110
        %v2160 = vpack.c.b16 %v2113, %v2112
        %v2161 = vpack.c.b16 %v2115, %v2114
        %v2162 = vpack.c.b16 %v2117, %v2116
        %v2163 = vpack.c.b16 %v2119, %v2118
        %v2164 = vpack.c.b16 %v2121, %v2120
        %v2165 = vpack.c.b16 %v2123, %v2122
        %v2166 = vpack.c.b16 %v2125, %v2124
        %v2167 = vpack.c.b16 %v2127, %v2126
        %v2168 = vpack.c.b16 %v2129, %v2128
        %v2169 = vpack.c.b16 %v2131, %v2130
        %v2170 = vpack.c.b16 %v2133, %v2132
        %v2171 = vpack.c.b16 %v2135, %v2134
        %v2208 = vsel %vm1319, %v1826, 0
        %v2210 = vsel %vm1319, %v1827, 0
        %v2212 = vsel %vm1319, %v1828, 0
        %v2215 = vsel %vm1319, %v1867, 0
        %2217 = vmatprep.subr.bf16.mxu0 0
        %2218 = vmatpush1.bf16.msra.mxu0 %v2143
        %2219 = vmatprep.subr.bf16.mxu0 0
        %2220 = vmatpush1.bf16.msra.mxu0 %v2142
        %2221 = vmatprep.subr.bf16.mxu0 0
        %2222 = vmatpush1.bf16.msra.mxu0 %v2141
        %2223 = vmatprep.subr.bf16.mxu0 0
        %2224 = vmatpush1.bf16.msra.mxu0 %v2140
        %2225 = vmatprep.subr.bf16.mxu0 0
        %2226 = vmatpush1.bf16.msra.mxu0 %v2139
        %2227 = vmatprep.subr.bf16.mxu0 0
        %2228 = vmatpush1.bf16.msra.mxu0 %v2138
        %2229 = vmatprep.subr.bf16.mxu0 0
        %2230 = vmatpush1.bf16.msra.mxu0 %v2137
        %2231 = vmatprep.subr.bf16.mxu0 0
        %2232 = vmatpush1.bf16.msra.mxu0 %v2136
        %2233 = vmatprep.subr.bf16.mxu0 0
        %2234 = vmatpush2.bf16.msra.mxu0 %v2151
        %2235 = vmatprep.subr.bf16.mxu0 0
        %2236 = vmatpush2.bf16.msra.mxu0 %v2150
        %2237 = vmatprep.subr.bf16.mxu0 0
        %2238 = vmatpush2.bf16.msra.mxu0 %v2149
        %2239 = vmatprep.subr.bf16.mxu0 0
        %2240 = vmatpush2.bf16.msra.mxu0 %v2148
        %2241 = vmatprep.subr.bf16.mxu0 0
        %2242 = vmatpush2.bf16.msra.mxu0 %v2147
        %2243 = vmatprep.subr.bf16.mxu0 0
        %2244 = vmatpush2.bf16.msra.mxu0 %v2146
        %2245 = vmatprep.subr.bf16.mxu0 0
        %2246 = vmatpush2.bf16.msra.mxu0 %v2145
        %2247 = vmatprep.subr.bf16.mxu0 0
        %2248 = vmatpush2.bf16.msra.mxu0 %v2144
        %2249 = vmatprep.mubr.bf16.mxu0 %v1886
        %2250 = vmatmul.mubr.bf16.gmra.mxu0 %v1870
        %v2251 = vpop.f32.mrf.mxu0
        %v2252 = vadd.f32 0.0, %v2251
        %v2253 = vpop.f32.mrf.mxu0
        %v2254 = vpop.f32.mrf.mxu0
        %v2255 = vadd.f32 0.0, %v2254
        %v2256 = vpop.f32.mrf.mxu0
        %2257 = vmatprep.mubr.bf16.mxu0 %v1890
        %2258 = vmatmul.mubr.bf16.gmra.mxu0 %v1874
        %v2259 = vpop.f32.mrf.mxu0
        %v2260 = vadd.f32 0.0, %v2259
        %v2261 = vpop.f32.mrf.mxu0
        %v2262 = vpop.f32.mrf.mxu0
        %v2263 = vadd.f32 0.0, %v2262
        %v2264 = vpop.f32.mrf.mxu0
        %2265 = vmatprep.mubr.bf16.mxu0 %v1894
        %2266 = vmatmul.mubr.bf16.gmra.mxu0 %v1878
        %v2267 = vpop.f32.mrf.mxu0
        %v2268 = vadd.f32 0.0, %v2267
        %v2269 = vpop.f32.mrf.mxu0
        %v2270 = vpop.f32.mrf.mxu0
        %v2271 = vadd.f32 0.0, %v2270
        %v2272 = vpop.f32.mrf.mxu0
        %2273 = vmatprep.mubr.bf16.mxu0 %v1898
        %2274 = vmatmul.mubr.bf16.gmra.mxu0 %v1882
        %v2275 = vpop.f32.mrf.mxu0
        %v2276 = vadd.f32 0.0, %v2275
        %v2277 = vpop.f32.mrf.mxu0
        %v2278 = vpop.f32.mrf.mxu0
        %v2279 = vadd.f32 0.0, %v2278
        %v2280 = vpop.f32.mrf.mxu0
        %2281 = vdwg.mxu0
        %2282 = vmatprep.subr.bf16.mxu0 0
        %2283 = vmatpush1.bf16.msra.mxu0 %v2159
        %2284 = vmatprep.subr.bf16.mxu0 0
        %2285 = vmatpush1.bf16.msra.mxu0 %v2158
        %2286 = vmatprep.subr.bf16.mxu0 0
        %2287 = vmatpush1.bf16.msra.mxu0 %v2157
        %2288 = vmatprep.subr.bf16.mxu0 0
        %2289 = vmatpush1.bf16.msra.mxu0 %v2156
        %2290 = vmatprep.subr.bf16.mxu0 0
        %2291 = vmatpush1.bf16.msra.mxu0 %v2155
        %2292 = vmatprep.subr.bf16.mxu0 0
        %2293 = vmatpush1.bf16.msra.mxu0 %v2154
        %2294 = vmatprep.subr.bf16.mxu0 0
        %2295 = vmatpush1.bf16.msra.mxu0 %v2153
        %2296 = vmatprep.subr.bf16.mxu0 0
        %2297 = vmatpush1.bf16.msra.mxu0 %v2152
        %2298 = vmatprep.subr.bf16.mxu0 0
        %2299 = vmatpush2.bf16.msra.mxu0 %v2167
        %2300 = vmatprep.subr.bf16.mxu0 0
        %2301 = vmatpush2.bf16.msra.mxu0 %v2166
        %2302 = vmatprep.subr.bf16.mxu0 0
        %2303 = vmatpush2.bf16.msra.mxu0 %v2165
        %2304 = vmatprep.subr.bf16.mxu0 0
        %2305 = vmatpush2.bf16.msra.mxu0 %v2164
        %2306 = vmatprep.subr.bf16.mxu0 0
        %2307 = vmatpush2.bf16.msra.mxu0 %v2163
        %2308 = vmatprep.subr.bf16.mxu0 0
        %2309 = vmatpush2.bf16.msra.mxu0 %v2162
        %2310 = vmatprep.subr.bf16.mxu0 0
        %2311 = vmatpush2.bf16.msra.mxu0 %v2161
        %2312 = vmatprep.subr.bf16.mxu0 0
        %2313 = vmatpush2.bf16.msra.mxu0 %v2160
        %2314 = vmatprep.mubr.bf16.mxu0 %v1874
        %2315 = vmatmul.mubr.bf16.gmra.mxu0 %v1902
        %v2316 = vpop.f32.mrf.mxu0
        %v2317 = vadd.f32 %v2252, %v2316
        %v2318 = vpop.f32.mrf.mxu0
        %v2319 = vpop.f32.mrf.mxu0
        %v2320 = vadd.f32 %v2255, %v2319
        %v2321 = vpop.f32.mrf.mxu0
        %2322 = vmatprep.mubr.bf16.mxu0 %v1878
        %2323 = vmatmul.mubr.bf16.gmra.mxu0 %v1906
        %v2324 = vpop.f32.mrf.mxu0
        %v2325 = vadd.f32 %v2260, %v2324
        %v2326 = vpop.f32.mrf.mxu0
        %v2327 = vpop.f32.mrf.mxu0
        %v2328 = vadd.f32 %v2263, %v2327
        %v2329 = vpop.f32.mrf.mxu0
        %2330 = vmatprep.mubr.bf16.mxu0 %v1882
        %2331 = vmatmul.mubr.bf16.gmra.mxu0 %v1910
        %v2332 = vpop.f32.mrf.mxu0
        %v2333 = vadd.f32 %v2268, %v2332
        %v2334 = vpop.f32.mrf.mxu0
        %v2335 = vpop.f32.mrf.mxu0
        %v2336 = vadd.f32 %v2271, %v2335
        %v2337 = vpop.f32.mrf.mxu0
        %2338 = vmatprep.mubr.bf16.mxu0 %v1918
        %2339 = vmatmul.mubr.bf16.gmra.mxu0 %v1914
        %v2340 = vpop.f32.mrf.mxu0
        %v2341 = vadd.f32 %v2276, %v2340
        %v2342 = vpop.f32.mrf.mxu0
        %v2343 = vpop.f32.mrf.mxu0
        %v2344 = vadd.f32 %v2279, %v2343
        %v2345 = vpop.f32.mrf.mxu0
        %2346 = vdwg.mxu0
        %2347 = vmatprep.subr.bf16.mxu0 0
        %2348 = vmatpush1.bf16.msra.mxu0 0
        %2349 = vmatprep.subr.bf16.mxu0 0
        %2350 = vmatpush1.bf16.msra.mxu0 0
        %2351 = vmatprep.subr.bf16.mxu0 0
        %2352 = vmatpush1.bf16.msra.mxu0 0
        %2353 = vmatprep.subr.bf16.mxu0 0
        %2354 = vmatpush1.bf16.msra.mxu0 0
        %2355 = vmatprep.subr.bf16.mxu0 0
        %2356 = vmatpush1.bf16.msra.mxu0 %v2171
        %2357 = vmatprep.subr.bf16.mxu0 0
        %2358 = vmatpush1.bf16.msra.mxu0 %v2170
        %2359 = vmatprep.subr.bf16.mxu0 0
        %2360 = vmatpush1.bf16.msra.mxu0 %v2169
        %2361 = vmatprep.subr.bf16.mxu0 0
        %2362 = vmatpush1.bf16.msra.mxu0 %v2168
        %2363 = vmatprep.subr.bf16.mxu0 0
        %2364 = vmatpush2.bf16.msra.mxu0 0
        %2365 = vmatprep.subr.bf16.mxu0 0
        %2366 = vmatpush2.bf16.msra.mxu0 0
        %2367 = vmatprep.subr.bf16.mxu0 0
        %2368 = vmatpush2.bf16.msra.mxu0 0
        %2369 = vmatprep.subr.bf16.mxu0 0
        %2370 = vmatpush2.bf16.msra.mxu0 0
        %2371 = vmatprep.subr.bf16.mxu0 0
        %2372 = vmatpush2.bf16.msra.mxu0 0
        %2373 = vmatprep.subr.bf16.mxu0 0
        %2374 = vmatpush2.bf16.msra.mxu0 0
        %2375 = vmatprep.subr.bf16.mxu0 0
        %2376 = vmatpush2.bf16.msra.mxu0 0
        %2377 = vmatprep.subr.bf16.mxu0 0
        %2378 = vmatpush2.bf16.msra.mxu0 0
        %2379 = vmatprep.mubr.bf16.mxu0 0
        %2380 = vmatmul.mubr.bf16.gmra.mxu0 %v2208
        %v2381 = vpop.f32.mrf.mxu0
        %v2382 = vadd.f32 %v2317, %v2381
        %v2383 = vpop.f32.mrf.mxu0
        %v2384 = vpop.f32.mrf.mxu0
        %v2385 = vadd.f32 %v2320, %v2384
        %v2386 = vpop.f32.mrf.mxu0
        %2387 = vmatprep.mubr.bf16.mxu0 0
        %2388 = vmatmul.mubr.bf16.gmra.mxu0 %v2210
        %v2389 = vpop.f32.mrf.mxu0
        %v2390 = vadd.f32 %v2325, %v2389
        %v2391 = vpop.f32.mrf.mxu0
        %v2392 = vpop.f32.mrf.mxu0
        %v2393 = vadd.f32 %v2328, %v2392
        %v2394 = vpop.f32.mrf.mxu0
        %2395 = vmatprep.mubr.bf16.mxu0 0
        %2396 = vmatmul.mubr.bf16.gmra.mxu0 %v2212
        %v2397 = vpop.f32.mrf.mxu0
        %v2398 = vadd.f32 %v2333, %v2397
        %v2399 = vpop.f32.mrf.mxu0
        %v2400 = vpop.f32.mrf.mxu0
        %v2401 = vadd.f32 %v2336, %v2400
        %v2402 = vpop.f32.mrf.mxu0
        %2403 = vmatprep.mubr.bf16.mxu0 0
        %2404 = vmatmul.mubr.bf16.gmra.mxu0 %v2215
        %v2405 = vpop.f32.mrf.mxu0
        %v2406 = vadd.f32 %v2341, %v2405
        %v2407 = vpop.f32.mrf.mxu0
        %v2408 = vpop.f32.mrf.mxu0
        %v2409 = vadd.f32 %v2344, %v2408
        %v2410 = vpop.f32.mrf.mxu0
        %2411 = vdwg.mxu0
        %v2412 = vld [vmem:[%s4] sm:$0xf]
        %v2413 = vld [vmem:[%s4 + $0x4] sm:$0xf]
        %v2414 = vld [vmem:[%s4 + $0x8] sm:$0xf]
        %v2415 = vld [vmem:[%s4 + $0xc] sm:$0xf]
        %v2416 = vld [vmem:[%s4 + $0x10] sm:$0xf]
        %v2417 = vld [vmem:[%s4 + $0x14] sm:$0xf]
        %v2418 = vld [vmem:[%s4 + $0x18] sm:$0xf]
        %v2419 = vld [vmem:[%s4 + $0x1c] sm:$0xf]
        %v2420 = vld [vmem:[%s4 + $0x20] sm:$0xf]
        %v2421 = vld [vmem:[%s4 + $0x24] sm:$0xf]
        %v2422 = vld [vmem:[%s4 + $0x28] sm:$0xf]
        %v2423 = vld [vmem:[%s4 + $0x2c] sm:$0xf]
        %v2424 = vld [vmem:[%s4 + $0x30] sm:$0xf]
        %v2425 = vld [vmem:[%s4 + $0x34] sm:$0xf]
        %v2426 = vld [vmem:[%s4 + $0x38] sm:$0xf]
        %v2427 = vld [vmem:[%s4 + $0x3c] sm:$0xf]
        %v2428 = vld [vmem:[%s4 + $0x40] sm:$0xf]
        %v2429 = vld [vmem:[%s4 + $0x44] sm:$0xf]
        %v2430 = vld [vmem:[%s4 + $0x48] sm:$0xf]
        %v2431 = vld [vmem:[%s4 + $0x4c] sm:$0xf]
        %v2432 = vld [vmem:[%s4 + $0x50] sm:$0xf]
        %v2433 = vld [vmem:[%s4 + $0x54] sm:$0xf]
        %v2434 = vld [vmem:[%s4 + $0x58] sm:$0xf]
        %v2435 = vld [vmem:[%s4 + $0x5c] sm:$0xf]
        %v2436 = vld [vmem:[%s4 + $0x60] sm:$0xf]
        %v2437 = vld [vmem:[%s4 + $0x64] sm:$0xf]
        %v2438 = vld [vmem:[%s4 + $0x68] sm:$0xf]
        %v2439 = vld [vmem:[%s4 + $0x6c] sm:$0xf]
        %v2440 = vld [vmem:[%s4 + $0x70] sm:$0xf]
        %v2441 = vld [vmem:[%s4 + $0x74] sm:$0xf]
        %v2442 = vld [vmem:[%s4 + $0x78] sm:$0xf]
        %v2443 = vld [vmem:[%s4 + $0x7c] sm:$0xf]
        %v2444 = vpack.c.bf16 %v2385, %v2382
        %v2445 = vpack.c.bf16 %v2393, %v2390
        %v2446 = vpack.c.bf16 %v2401, %v2398
        %v2447 = vpack.c.bf16 %v2409, %v2406
        %v2480 = vunpack.c.l.b16 %v2412
        %v2481 = vunpack.c.l.b16 %v2413
        %v2482 = vunpack.c.l.b16 %v2414
        %v2483 = vunpack.c.l.b16 %v2415
        %v2484 = vunpack.c.l.b16 %v2416
        %v2485 = vunpack.c.l.b16 %v2417
        %v2486 = vunpack.c.l.b16 %v2418
        %v2487 = vunpack.c.l.b16 %v2419
        %v2488 = vunpack.c.l.b16 %v2420
        %v2489 = vunpack.c.l.b16 %v2421
        %v2490 = vunpack.c.l.b16 %v2422
        %v2491 = vunpack.c.l.b16 %v2423
        %v2492 = vunpack.c.l.b16 %v2424
        %v2493 = vunpack.c.l.b16 %v2425
        %v2494 = vunpack.c.l.b16 %v2426
        %v2495 = vunpack.c.l.b16 %v2427
        %v2496 = vunpack.c.l.b16 %v2428
        %v2497 = vunpack.c.l.b16 %v2429
        %v2498 = vunpack.c.l.b16 %v2430
        %v2499 = vunpack.c.l.b16 %v2431
        %v2500 = vunpack.c.l.b16 %v2432
        %v2501 = vunpack.c.l.b16 %v2433
        %v2502 = vunpack.c.l.b16 %v2434
        %v2503 = vunpack.c.l.b16 %v2435
        %v2504 = vunpack.c.l.b16 %v2436
        %v2505 = vunpack.c.l.b16 %v2437
        %v2506 = vunpack.c.l.b16 %v2438
        %v2507 = vunpack.c.l.b16 %v2439
        %v2508 = vunpack.c.l.b16 %v2440
        %v2509 = vunpack.c.l.b16 %v2441
        %v2510 = vunpack.c.l.b16 %v2442
        %v2511 = vunpack.c.l.b16 %v2443
        %v2512 = vpack.c.b16 %v2481, %v2480
        %v2513 = vpack.c.b16 %v2483, %v2482
        %v2514 = vpack.c.b16 %v2485, %v2484
        %v2515 = vpack.c.b16 %v2487, %v2486
        %v2516 = vpack.c.b16 %v2489, %v2488
        %v2517 = vpack.c.b16 %v2491, %v2490
        %v2518 = vpack.c.b16 %v2493, %v2492
        %v2519 = vpack.c.b16 %v2495, %v2494
        %v2520 = vpack.c.b16 %v2497, %v2496
        %v2521 = vpack.c.b16 %v2499, %v2498
        %v2522 = vpack.c.b16 %v2501, %v2500
        %v2523 = vpack.c.b16 %v2503, %v2502
        %v2524 = vpack.c.b16 %v2505, %v2504
        %v2525 = vpack.c.b16 %v2507, %v2506
        %v2526 = vpack.c.b16 %v2509, %v2508
        %v2527 = vpack.c.b16 %v2511, %v2510
        %v2529 = vsel %vm1319, %v2512, 0
        %v2532 = vsel %vm1319, %v2513, 0
        %v2535 = vsel %vm1319, %v2514, 0
        %v2538 = vsel %vm1319, %v2515, 0
        %v2541 = vsel %vm1319, %v2516, 0
        %v2544 = vsel %vm1319, %v2517, 0
        %v2547 = vsel %vm1319, %v2518, 0
        %v2550 = vsel %vm1319, %v2519, 0
        %v2553 = vsel %vm1319, %v2520, 0
        %v2556 = vsel %vm1319, %v2521, 0
        %v2559 = vsel %vm1319, %v2522, 0
        %v2562 = vsel %vm1319, %v2523, 0
        %v2565 = vsel %vm1319, %v2524, 0
        %v2568 = vsel %vm1319, %v2525, 0
        %v2571 = vsel %vm1319, %v2526, 0
        %v2574 = vsel %vm1319, %v2527, 0
        %2576 = vmatprep.subr.bf16.mxu0 0
        %2577 = vmatpush1.bf16.msra.mxu0 0
        %2578 = vmatprep.subr.bf16.mxu0 0
        %2579 = vmatpush1.bf16.msra.mxu0 0
        %2580 = vmatprep.subr.bf16.mxu0 0
        %2581 = vmatpush1.bf16.msra.mxu0 0
        %2582 = vmatprep.subr.bf16.mxu0 0
        %2583 = vmatpush1.bf16.msra.mxu0 0
        %2584 = vmatprep.subr.bf16.mxu0 0
        %2585 = vmatpush1.bf16.msra.mxu0 %v2447
        %2586 = vmatprep.subr.bf16.mxu0 0
        %2587 = vmatpush1.bf16.msra.mxu0 %v2446
        %2588 = vmatprep.subr.bf16.mxu0 0
        %2589 = vmatpush1.bf16.msra.mxu0 %v2445
        %2590 = vmatprep.subr.bf16.mxu0 0
        %2591 = vmatpush1.bf16.msra.mxu0 %v2444
        %2592 = vmatprep.subr.bf16.mxu0 0
        %2593 = vmatpush2.bf16.msra.mxu0 0
        %2594 = vmatprep.subr.bf16.mxu0 0
        %2595 = vmatpush2.bf16.msra.mxu0 0
        %2596 = vmatprep.subr.bf16.mxu0 0
        %2597 = vmatpush2.bf16.msra.mxu0 0
        %2598 = vmatprep.subr.bf16.mxu0 0
        %2599 = vmatpush2.bf16.msra.mxu0 0
        %2600 = vmatprep.subr.bf16.mxu0 0
        %2601 = vmatpush2.bf16.msra.mxu0 0
        %2602 = vmatprep.subr.bf16.mxu0 0
        %2603 = vmatpush2.bf16.msra.mxu0 0
        %2604 = vmatprep.subr.bf16.mxu0 0
        %2605 = vmatpush2.bf16.msra.mxu0 0
        %2606 = vmatprep.subr.bf16.mxu0 0
        %2607 = vmatpush2.bf16.msra.mxu0 0
        %2608 = vmatprep.mubr.bf16.mxu0 0
        %2609 = vmatmul.mubr.bf16.gmra.mxu0 %v2529
        %v2610 = vpop.f32.mrf.mxu0
        %v2611 = vadd.f32 0.0, %v2610
        %v2612 = vpop.f32.mrf.mxu0
        %v2613 = vpop.f32.mrf.mxu0
        %v2614 = vadd.f32 0.0, %v2613
        %v2615 = vpop.f32.mrf.mxu0
        %2616 = vmatprep.mubr.bf16.mxu0 0
        %2617 = vmatmul.mubr.bf16.gmra.mxu0 %v2532
        %v2618 = vpop.f32.mrf.mxu0
        %v2619 = vadd.f32 0.0, %v2618
        %v2620 = vpop.f32.mrf.mxu0
        %v2621 = vpop.f32.mrf.mxu0
        %v2622 = vadd.f32 0.0, %v2621
        %v2623 = vpop.f32.mrf.mxu0
        %2624 = vmatprep.mubr.bf16.mxu0 0
        %2625 = vmatmul.mubr.bf16.gmra.mxu0 %v2535
        %v2626 = vpop.f32.mrf.mxu0
        %v2627 = vadd.f32 0.0, %v2626
        %v2628 = vpop.f32.mrf.mxu0
        %v2629 = vpop.f32.mrf.mxu0
        %v2630 = vadd.f32 0.0, %v2629
        %v2631 = vpop.f32.mrf.mxu0
        %2632 = vmatprep.mubr.bf16.mxu0 0
        %2633 = vmatmul.mubr.bf16.gmra.mxu0 %v2538
        %v2634 = vpop.f32.mrf.mxu0
        %v2635 = vadd.f32 0.0, %v2634
        %v2636 = vpop.f32.mrf.mxu0
        %v2637 = vpop.f32.mrf.mxu0
        %v2638 = vadd.f32 0.0, %v2637
        %v2639 = vpop.f32.mrf.mxu0
        %2640 = vmatprep.mubr.bf16.mxu0 0
        %2641 = vmatmul.mubr.bf16.gmra.mxu0 %v2541
        %v2642 = vpop.f32.mrf.mxu0
        %v2643 = vadd.f32 0.0, %v2642
        %v2644 = vpop.f32.mrf.mxu0
        %v2645 = vpop.f32.mrf.mxu0
        %v2646 = vadd.f32 0.0, %v2645
        %v2647 = vpop.f32.mrf.mxu0
        %2648 = vmatprep.mubr.bf16.mxu0 0
        %2649 = vmatmul.mubr.bf16.gmra.mxu0 %v2544
        %v2650 = vpop.f32.mrf.mxu0
        %v2651 = vadd.f32 0.0, %v2650
        %v2652 = vpop.f32.mrf.mxu0
        %v2653 = vpop.f32.mrf.mxu0
        %v2654 = vadd.f32 0.0, %v2653
        %v2655 = vpop.f32.mrf.mxu0
        %2656 = vmatprep.mubr.bf16.mxu0 0
        %2657 = vmatmul.mubr.bf16.gmra.mxu0 %v2547
        %v2658 = vpop.f32.mrf.mxu0
        %v2659 = vadd.f32 0.0, %v2658
        %v2660 = vpop.f32.mrf.mxu0
        %v2661 = vpop.f32.mrf.mxu0
        %v2662 = vadd.f32 0.0, %v2661
        %v2663 = vpop.f32.mrf.mxu0
        %2664 = vmatprep.mubr.bf16.mxu0 0
        %2665 = vmatmul.mubr.bf16.gmra.mxu0 %v2550
        %v2666 = vpop.f32.mrf.mxu0
        %v2667 = vadd.f32 0.0, %v2666
        %v2668 = vpop.f32.mrf.mxu0
        %v2669 = vpop.f32.mrf.mxu0
        %v2670 = vadd.f32 0.0, %v2669
        %v2671 = vpop.f32.mrf.mxu0
        %2672 = vmatprep.mubr.bf16.mxu0 0
        %2673 = vmatmul.mubr.bf16.gmra.mxu0 %v2553
        %v2674 = vpop.f32.mrf.mxu0
        %v2675 = vadd.f32 0.0, %v2674
        %v2676 = vpop.f32.mrf.mxu0
        %v2677 = vpop.f32.mrf.mxu0
        %v2678 = vadd.f32 0.0, %v2677
        %v2679 = vpop.f32.mrf.mxu0
        %2680 = vmatprep.mubr.bf16.mxu0 0
        %2681 = vmatmul.mubr.bf16.gmra.mxu0 %v2556
        %v2682 = vpop.f32.mrf.mxu0
        %v2683 = vadd.f32 0.0, %v2682
        %v2684 = vpop.f32.mrf.mxu0
        %v2685 = vpop.f32.mrf.mxu0
        %v2686 = vadd.f32 0.0, %v2685
        %v2687 = vpop.f32.mrf.mxu0
        %2688 = vmatprep.mubr.bf16.mxu0 0
        %2689 = vmatmul.mubr.bf16.gmra.mxu0 %v2559
        %v2690 = vpop.f32.mrf.mxu0
        %v2691 = vadd.f32 0.0, %v2690
        %v2692 = vpop.f32.mrf.mxu0
        %v2693 = vpop.f32.mrf.mxu0
        %v2694 = vadd.f32 0.0, %v2693
        %v2695 = vpop.f32.mrf.mxu0
        %2696 = vmatprep.mubr.bf16.mxu0 0
        %2697 = vmatmul.mubr.bf16.gmra.mxu0 %v2562
        %v2698 = vpop.f32.mrf.mxu0
        %v2699 = vadd.f32 0.0, %v2698
        %v2700 = vpop.f32.mrf.mxu0
        %v2701 = vpop.f32.mrf.mxu0
        %v2702 = vadd.f32 0.0, %v2701
        %v2703 = vpop.f32.mrf.mxu0
        %2704 = vmatprep.mubr.bf16.mxu0 0
        %2705 = vmatmul.mubr.bf16.gmra.mxu0 %v2565
        %v2706 = vpop.f32.mrf.mxu0
        %v2707 = vadd.f32 0.0, %v2706
        %v2708 = vpop.f32.mrf.mxu0
        %v2709 = vpop.f32.mrf.mxu0
        %v2710 = vadd.f32 0.0, %v2709
        %v2711 = vpop.f32.mrf.mxu0
        %2712 = vmatprep.mubr.bf16.mxu0 0
        %2713 = vmatmul.mubr.bf16.gmra.mxu0 %v2568
        %v2714 = vpop.f32.mrf.mxu0
        %v2715 = vadd.f32 0.0, %v2714
        %v2716 = vpop.f32.mrf.mxu0
        %v2717 = vpop.f32.mrf.mxu0
        %v2718 = vadd.f32 0.0, %v2717
        %v2719 = vpop.f32.mrf.mxu0
        %2720 = vmatprep.mubr.bf16.mxu0 0
        %2721 = vmatmul.mubr.bf16.gmra.mxu0 %v2571
        %v2722 = vpop.f32.mrf.mxu0
        %v2723 = vadd.f32 0.0, %v2722
        %v2724 = vpop.f32.mrf.mxu0
        %v2725 = vpop.f32.mrf.mxu0
        %v2726 = vadd.f32 0.0, %v2725
        %v2727 = vpop.f32.mrf.mxu0
        %2728 = vmatprep.mubr.bf16.mxu0 0
        %2729 = vmatmul.mubr.bf16.gmra.mxu0 %v2574
        %v2730 = vpop.f32.mrf.mxu0
        %v2731 = vadd.f32 0.0, %v2730
        %v2732 = vpop.f32.mrf.mxu0
        %v2733 = vpop.f32.mrf.mxu0
        %v2734 = vadd.f32 0.0, %v2733
        %v2735 = vpop.f32.mrf.mxu0
        %2736 = vdwg.mxu0
        %v2773 = vunpack.c.l.b16 %v1529
        %v2774 = vunpack.c.l.b16 %v1530
        %v2775 = vunpack.c.l.b16 %v1531
        %v2776 = vunpack.c.l.b16 %v1532
        %v2777 = vunpack.c.l.b16 %v1533
        %v2778 = vunpack.c.l.b16 %v1534
        %v2779 = vunpack.c.l.b16 %v1535
        %v2780 = vunpack.c.l.b16 %v1536
        %v2781 = vunpack.c.l.b16 %v1537
        %v2782 = vunpack.c.l.b16 %v1538
        %v2783 = vunpack.c.l.b16 %v1539
        %v2784 = vunpack.c.l.b16 %v1540
        %v2785 = vunpack.c.l.b16 %v1541
        %v2786 = vunpack.c.l.b16 %v1542
        %v2787 = vunpack.c.l.b16 %v1543
        %v2788 = vunpack.c.l.b16 %v1544
        %v2789 = vunpack.c.l.b16 %v1545
        %v2790 = vunpack.c.l.b16 %v1546
        %v2791 = vunpack.c.l.b16 %v1547
        %v2792 = vunpack.c.l.b16 %v1548
        %v2793 = vunpack.c.l.b16 %v1549
        %v2794 = vunpack.c.l.b16 %v1550
        %v2795 = vunpack.c.l.b16 %v1551
        %v2796 = vunpack.c.l.b16 %v1552
        %v2797 = vunpack.c.l.b16 %v1553
        %v2798 = vunpack.c.l.b16 %v1554
        %v2799 = vunpack.c.l.b16 %v1555
        %v2800 = vunpack.c.l.b16 %v1556
        %v2801 = vunpack.c.l.b16 %v1557
        %v2802 = vunpack.c.l.b16 %v1558
        %v2803 = vunpack.c.l.b16 %v1559
        %v2804 = vunpack.c.l.b16 %v1560
        %v2805 = vunpack.c.l.b16 %v1561
        %v2806 = vunpack.c.l.b16 %v1562
        %v2807 = vunpack.c.l.b16 %v1563
        %v2808 = vunpack.c.l.b16 %v1564
        %v2809 = vpack.c.b16 %v2774, %v2773
        %v2810 = vpack.c.b16 %v2776, %v2775
        %v2811 = vpack.c.b16 %v2778, %v2777
        %v2812 = vpack.c.b16 %v2780, %v2779
        %v2813 = vpack.c.b16 %v2782, %v2781
        %v2814 = vpack.c.b16 %v2784, %v2783
        %v2815 = vpack.c.b16 %v2786, %v2785
        %v2816 = vpack.c.b16 %v2788, %v2787
        %v2817 = vpack.c.b16 %v2790, %v2789
        %v2818 = vpack.c.b16 %v2792, %v2791
        %v2819 = vpack.c.b16 %v2794, %v2793
        %v2820 = vpack.c.b16 %v2796, %v2795
        %v2821 = vpack.c.b16 %v2798, %v2797
        %v2822 = vpack.c.b16 %v2800, %v2799
        %v2823 = vpack.c.b16 %v2802, %v2801
        %v2824 = vpack.c.b16 %v2804, %v2803
        %v2825 = vpack.c.b16 %v2806, %v2805
        %v2826 = vpack.c.b16 %v2808, %v2807
        %v2846 = vsel %vm1270, %v1078, 0
        %v2849 = vsel %vm1270, %v1079, 0
        %v2852 = vsel %vm1270, %v1080, 0
        %v2855 = vsel %vm1270, %v1081, 0
        %v2858 = vsel %vm1270, %v1082, 0
        %v2861 = vsel %vm1270, %v1083, 0
        %v2864 = vsel %vm1270, %v1084, 0
        %v2867 = vsel %vm1270, %v1085, 0
        %v2870 = vsel %vm1270, %v1086, 0
        %v2873 = vsel %vm1270, %v1087, 0
        %v2876 = vsel %vm1270, %v1088, 0
        %v2879 = vsel %vm1270, %v1089, 0
        %v2882 = vsel %vm1270, %v1090, 0
        %v2885 = vsel %vm1270, %v1091, 0
        %v2888 = vsel %vm1270, %v1164, 0
        %v2891 = vsel %vm1270, %v1269, 0
        %2893 = vmatprep.subr.bf16.mxu0 0
        %2894 = vmatpush1.bf16.msra.mxu0 %v2816
        %2895 = vmatprep.subr.bf16.mxu0 0
        %2896 = vmatpush1.bf16.msra.mxu0 %v2815
        %2897 = vmatprep.subr.bf16.mxu0 0
        %2898 = vmatpush1.bf16.msra.mxu0 %v2814
        %2899 = vmatprep.subr.bf16.mxu0 0
        %2900 = vmatpush1.bf16.msra.mxu0 %v2813
        %2901 = vmatprep.subr.bf16.mxu0 0
        %2902 = vmatpush1.bf16.msra.mxu0 %v2812
        %2903 = vmatprep.subr.bf16.mxu0 0
        %2904 = vmatpush1.bf16.msra.mxu0 %v2811
        %2905 = vmatprep.subr.bf16.mxu0 0
        %2906 = vmatpush1.bf16.msra.mxu0 %v2810
        %2907 = vmatprep.subr.bf16.mxu0 0
        %2908 = vmatpush1.bf16.msra.mxu0 %v2809
        %2909 = vmatprep.subr.bf16.mxu0 0
        %2910 = vmatpush2.bf16.msra.mxu0 %v2824
        %2911 = vmatprep.subr.bf16.mxu0 0
        %2912 = vmatpush2.bf16.msra.mxu0 %v2823
        %2913 = vmatprep.subr.bf16.mxu0 0
        %2914 = vmatpush2.bf16.msra.mxu0 %v2822
        %2915 = vmatprep.subr.bf16.mxu0 0
        %2916 = vmatpush2.bf16.msra.mxu0 %v2821
        %2917 = vmatprep.subr.bf16.mxu0 0
        %2918 = vmatpush2.bf16.msra.mxu0 %v2820
        %2919 = vmatprep.subr.bf16.mxu0 0
        %2920 = vmatpush2.bf16.msra.mxu0 %v2819
        %2921 = vmatprep.subr.bf16.mxu0 0
        %2922 = vmatpush2.bf16.msra.mxu0 %v2818
        %2923 = vmatprep.subr.bf16.mxu0 0
        %2924 = vmatpush2.bf16.msra.mxu0 %v2817
        %2925 = vmatprep.mubr.bf16.mxu0 %v1482
        %2926 = vmatmul.mubr.bf16.gmra.mxu0 %v1354
        %v2927 = vpop.f32.mrf.mxu0
        %v2928 = vadd.f32 %v2611, %v2927
        %v2929 = vpop.f32.mrf.mxu0
        %v2930 = vpop.f32.mrf.mxu0
        %v2931 = vadd.f32 %v2614, %v2930
        %v2932 = vpop.f32.mrf.mxu0
        %2933 = vmatprep.mubr.bf16.mxu0 %v1485
        %2934 = vmatmul.mubr.bf16.gmra.mxu0 %v1357
        %v2935 = vpop.f32.mrf.mxu0
        %v2936 = vadd.f32 %v2619, %v2935
        %v2937 = vpop.f32.mrf.mxu0
        %v2938 = vpop.f32.mrf.mxu0
        %v2939 = vadd.f32 %v2622, %v2938
        %v2940 = vpop.f32.mrf.mxu0
        %2941 = vmatprep.mubr.bf16.mxu0 %v1488
        %2942 = vmatmul.mubr.bf16.gmra.mxu0 %v1360
        %v2943 = vpop.f32.mrf.mxu0
        %v2944 = vadd.f32 %v2627, %v2943
        %v2945 = vpop.f32.mrf.mxu0
        %v2946 = vpop.f32.mrf.mxu0
        %v2947 = vadd.f32 %v2630, %v2946
        %v2948 = vpop.f32.mrf.mxu0
        %2949 = vmatprep.mubr.bf16.mxu0 %v1491
        %2950 = vmatmul.mubr.bf16.gmra.mxu0 %v1363
        %v2951 = vpop.f32.mrf.mxu0
        %v2952 = vadd.f32 %v2635, %v2951
        %v2953 = vpop.f32.mrf.mxu0
        %v2954 = vpop.f32.mrf.mxu0
        %v2955 = vadd.f32 %v2638, %v2954
        %v2956 = vpop.f32.mrf.mxu0
        %2957 = vmatprep.mubr.bf16.mxu0 %v1494
        %2958 = vmatmul.mubr.bf16.gmra.mxu0 %v1366
        %v2959 = vpop.f32.mrf.mxu0
        %v2960 = vadd.f32 %v2643, %v2959
        %v2961 = vpop.f32.mrf.mxu0
        %v2962 = vpop.f32.mrf.mxu0
        %v2963 = vadd.f32 %v2646, %v2962
        %v2964 = vpop.f32.mrf.mxu0
        %2965 = vmatprep.mubr.bf16.mxu0 %v1497
        %2966 = vmatmul.mubr.bf16.gmra.mxu0 %v1369
        %v2967 = vpop.f32.mrf.mxu0
        %v2968 = vadd.f32 %v2651, %v2967
        %v2969 = vpop.f32.mrf.mxu0
        %v2970 = vpop.f32.mrf.mxu0
        %v2971 = vadd.f32 %v2654, %v2970
        %v2972 = vpop.f32.mrf.mxu0
        %2973 = vmatprep.mubr.bf16.mxu0 %v1500
        %2974 = vmatmul.mubr.bf16.gmra.mxu0 %v1372
        %v2975 = vpop.f32.mrf.mxu0
        %v2976 = vadd.f32 %v2659, %v2975
        %v2977 = vpop.f32.mrf.mxu0
        %v2978 = vpop.f32.mrf.mxu0
        %v2979 = vadd.f32 %v2662, %v2978
        %v2980 = vpop.f32.mrf.mxu0
        %2981 = vmatprep.mubr.bf16.mxu0 %v1503
        %2982 = vmatmul.mubr.bf16.gmra.mxu0 %v1375
        %v2983 = vpop.f32.mrf.mxu0
        %v2984 = vadd.f32 %v2667, %v2983
        %v2985 = vpop.f32.mrf.mxu0
        %v2986 = vpop.f32.mrf.mxu0
        %v2987 = vadd.f32 %v2670, %v2986
        %v2988 = vpop.f32.mrf.mxu0
        %2989 = vmatprep.mubr.bf16.mxu0 %v1506
        %2990 = vmatmul.mubr.bf16.gmra.mxu0 %v1378
        %v2991 = vpop.f32.mrf.mxu0
        %v2992 = vadd.f32 %v2675, %v2991
        %v2993 = vpop.f32.mrf.mxu0
        %v2994 = vpop.f32.mrf.mxu0
        %v2995 = vadd.f32 %v2678, %v2994
        %v2996 = vpop.f32.mrf.mxu0
        %2997 = vmatprep.mubr.bf16.mxu0 %v1509
        %2998 = vmatmul.mubr.bf16.gmra.mxu0 %v1381
        %v2999 = vpop.f32.mrf.mxu0
        %v3000 = vadd.f32 %v2683, %v2999
        %v3001 = vpop.f32.mrf.mxu0
        %v3002 = vpop.f32.mrf.mxu0
        %v3003 = vadd.f32 %v2686, %v3002
        %v3004 = vpop.f32.mrf.mxu0
        %3005 = vmatprep.mubr.bf16.mxu0 %v1512
        %3006 = vmatmul.mubr.bf16.gmra.mxu0 %v1384
        %v3007 = vpop.f32.mrf.mxu0
        %v3008 = vadd.f32 %v2691, %v3007
        %v3009 = vpop.f32.mrf.mxu0
        %v3010 = vpop.f32.mrf.mxu0
        %v3011 = vadd.f32 %v2694, %v3010
        %v3012 = vpop.f32.mrf.mxu0
        %3013 = vmatprep.mubr.bf16.mxu0 %v1515
        %3014 = vmatmul.mubr.bf16.gmra.mxu0 %v1387
        %v3015 = vpop.f32.mrf.mxu0
        %v3016 = vadd.f32 %v2699, %v3015
        %v3017 = vpop.f32.mrf.mxu0
        %v3018 = vpop.f32.mrf.mxu0
        %v3019 = vadd.f32 %v2702, %v3018
        %v3020 = vpop.f32.mrf.mxu0
        %3021 = vmatprep.mubr.bf16.mxu0 %v1518
        %3022 = vmatmul.mubr.bf16.gmra.mxu0 %v1390
        %v3023 = vpop.f32.mrf.mxu0
        %v3024 = vadd.f32 %v2707, %v3023
        %v3025 = vpop.f32.mrf.mxu0
        %v3026 = vpop.f32.mrf.mxu0
        %v3027 = vadd.f32 %v2710, %v3026
        %v3028 = vpop.f32.mrf.mxu0
        %3029 = vmatprep.mubr.bf16.mxu0 %v1521
        %3030 = vmatmul.mubr.bf16.gmra.mxu0 %v1393
        %v3031 = vpop.f32.mrf.mxu0
        %v3032 = vadd.f32 %v2715, %v3031
        %v3033 = vpop.f32.mrf.mxu0
        %v3034 = vpop.f32.mrf.mxu0
        %v3035 = vadd.f32 %v2718, %v3034
        %v3036 = vpop.f32.mrf.mxu0
        %3037 = vmatprep.mubr.bf16.mxu0 %v1524
        %3038 = vmatmul.mubr.bf16.gmra.mxu0 %v1396
        %v3039 = vpop.f32.mrf.mxu0
        %v3040 = vadd.f32 %v2723, %v3039
        %v3041 = vpop.f32.mrf.mxu0
        %v3042 = vpop.f32.mrf.mxu0
        %v3043 = vadd.f32 %v2726, %v3042
        %v3044 = vpop.f32.mrf.mxu0
        %3045 = vmatprep.mubr.bf16.mxu0 %v1527
        %3046 = vmatmul.mubr.bf16.gmra.mxu0 %v1399
        %v3047 = vpop.f32.mrf.mxu0
        %v3048 = vadd.f32 %v2731, %v3047
        %v3049 = vpop.f32.mrf.mxu0
        %v3050 = vpop.f32.mrf.mxu0
        %v3051 = vadd.f32 %v2734, %v3050
        %v3052 = vpop.f32.mrf.mxu0
        %3053 = vdwg.mxu0
        %3054 = vmatprep.subr.bf16.mxu0 0
        %3055 = vmatpush1.bf16.msra.mxu0 0
        %3056 = vmatprep.subr.bf16.mxu0 0
        %3057 = vmatpush1.bf16.msra.mxu0 0
        %3058 = vmatprep.subr.bf16.mxu0 0
        %3059 = vmatpush1.bf16.msra.mxu0 0
        %3060 = vmatprep.subr.bf16.mxu0 0
        %3061 = vmatpush1.bf16.msra.mxu0 0
        %3062 = vmatprep.subr.bf16.mxu0 0
        %3063 = vmatpush1.bf16.msra.mxu0 0
        %3064 = vmatprep.subr.bf16.mxu0 0
        %3065 = vmatpush1.bf16.msra.mxu0 0
        %3066 = vmatprep.subr.bf16.mxu0 0
        %3067 = vmatpush1.bf16.msra.mxu0 %v2826
        %3068 = vmatprep.subr.bf16.mxu0 0
        %3069 = vmatpush1.bf16.msra.mxu0 %v2825
        %3070 = vmatprep.subr.bf16.mxu0 0
        %3071 = vmatpush2.bf16.msra.mxu0 0
        %3072 = vmatprep.subr.bf16.mxu0 0
        %3073 = vmatpush2.bf16.msra.mxu0 0
        %3074 = vmatprep.subr.bf16.mxu0 0
        %3075 = vmatpush2.bf16.msra.mxu0 0
        %3076 = vmatprep.subr.bf16.mxu0 0
        %3077 = vmatpush2.bf16.msra.mxu0 0
        %3078 = vmatprep.subr.bf16.mxu0 0
        %3079 = vmatpush2.bf16.msra.mxu0 0
        %3080 = vmatprep.subr.bf16.mxu0 0
        %3081 = vmatpush2.bf16.msra.mxu0 0
        %3082 = vmatprep.subr.bf16.mxu0 0
        %3083 = vmatpush2.bf16.msra.mxu0 0
        %3084 = vmatprep.subr.bf16.mxu0 0
        %3085 = vmatpush2.bf16.msra.mxu0 0
        %3086 = vmatprep.mubr.bf16.mxu0 0
        %3087 = vmatmul.mubr.bf16.gmra.mxu0 %v2846
        %v3088 = vpop.f32.mrf.mxu0
        %v3089 = vadd.f32 %v2928, %v3088
        %v3090 = vpop.f32.mrf.mxu0
        %v3091 = vpop.f32.mrf.mxu0
        %v3092 = vadd.f32 %v2931, %v3091
        %v3093 = vpop.f32.mrf.mxu0
        %3094 = vmatprep.mubr.bf16.mxu0 0
        %3095 = vmatmul.mubr.bf16.gmra.mxu0 %v2849
        %v3096 = vpop.f32.mrf.mxu0
        %v3097 = vadd.f32 %v2936, %v3096
        %v3098 = vpop.f32.mrf.mxu0
        %v3099 = vpop.f32.mrf.mxu0
        %v3100 = vadd.f32 %v2939, %v3099
        %v3101 = vpop.f32.mrf.mxu0
        %3102 = vmatprep.mubr.bf16.mxu0 0
        %3103 = vmatmul.mubr.bf16.gmra.mxu0 %v2852
        %v3104 = vpop.f32.mrf.mxu0
        %v3105 = vadd.f32 %v2944, %v3104
        %v3106 = vpop.f32.mrf.mxu0
        %v3107 = vpop.f32.mrf.mxu0
        %v3108 = vadd.f32 %v2947, %v3107
        %v3109 = vpop.f32.mrf.mxu0
        %3110 = vmatprep.mubr.bf16.mxu0 0
        %3111 = vmatmul.mubr.bf16.gmra.mxu0 %v2855
        %v3112 = vpop.f32.mrf.mxu0
        %v3113 = vadd.f32 %v2952, %v3112
        %v3114 = vpop.f32.mrf.mxu0
        %v3115 = vpop.f32.mrf.mxu0
        %v3116 = vadd.f32 %v2955, %v3115
        %v3117 = vpop.f32.mrf.mxu0
        %3118 = vmatprep.mubr.bf16.mxu0 0
        %3119 = vmatmul.mubr.bf16.gmra.mxu0 %v2858
        %v3120 = vpop.f32.mrf.mxu0
        %v3121 = vadd.f32 %v2960, %v3120
        %v3122 = vpop.f32.mrf.mxu0
        %v3123 = vpop.f32.mrf.mxu0
        %v3124 = vadd.f32 %v2963, %v3123
        %v3125 = vpop.f32.mrf.mxu0
        %3126 = vmatprep.mubr.bf16.mxu0 0
        %3127 = vmatmul.mubr.bf16.gmra.mxu0 %v2861
        %v3128 = vpop.f32.mrf.mxu0
        %v3129 = vadd.f32 %v2968, %v3128
        %v3130 = vpop.f32.mrf.mxu0
        %v3131 = vpop.f32.mrf.mxu0
        %v3132 = vadd.f32 %v2971, %v3131
        %v3133 = vpop.f32.mrf.mxu0
        %3134 = vmatprep.mubr.bf16.mxu0 0
        %3135 = vmatmul.mubr.bf16.gmra.mxu0 %v2864
        %v3136 = vpop.f32.mrf.mxu0
        %v3137 = vadd.f32 %v2976, %v3136
        %v3138 = vpop.f32.mrf.mxu0
        %v3139 = vpop.f32.mrf.mxu0
        %v3140 = vadd.f32 %v2979, %v3139
        %v3141 = vpop.f32.mrf.mxu0
        %3142 = vmatprep.mubr.bf16.mxu0 0
        %3143 = vmatmul.mubr.bf16.gmra.mxu0 %v2867
        %v3144 = vpop.f32.mrf.mxu0
        %v3145 = vadd.f32 %v2984, %v3144
        %v3146 = vpop.f32.mrf.mxu0
        %v3147 = vpop.f32.mrf.mxu0
        %v3148 = vadd.f32 %v2987, %v3147
        %v3149 = vpop.f32.mrf.mxu0
        %3150 = vmatprep.mubr.bf16.mxu0 0
        %3151 = vmatmul.mubr.bf16.gmra.mxu0 %v2870
        %v3152 = vpop.f32.mrf.mxu0
        %v3153 = vadd.f32 %v2992, %v3152
        %v3154 = vpop.f32.mrf.mxu0
        %v3155 = vpop.f32.mrf.mxu0
        %v3156 = vadd.f32 %v2995, %v3155
        %v3157 = vpop.f32.mrf.mxu0
        %3158 = vmatprep.mubr.bf16.mxu0 0
        %3159 = vmatmul.mubr.bf16.gmra.mxu0 %v2873
        %v3160 = vpop.f32.mrf.mxu0
        %v3161 = vadd.f32 %v3000, %v3160
        %v3162 = vpop.f32.mrf.mxu0
        %v3163 = vpop.f32.mrf.mxu0
        %v3164 = vadd.f32 %v3003, %v3163
        %v3165 = vpop.f32.mrf.mxu0
        %3166 = vmatprep.mubr.bf16.mxu0 0
        %3167 = vmatmul.mubr.bf16.gmra.mxu0 %v2876
        %v3168 = vpop.f32.mrf.mxu0
        %v3169 = vadd.f32 %v3008, %v3168
        %v3170 = vpop.f32.mrf.mxu0
        %v3171 = vpop.f32.mrf.mxu0
        %v3172 = vadd.f32 %v3011, %v3171
        %v3173 = vpop.f32.mrf.mxu0
        %3174 = vmatprep.mubr.bf16.mxu0 0
        %3175 = vmatmul.mubr.bf16.gmra.mxu0 %v2879
        %v3176 = vpop.f32.mrf.mxu0
        %v3177 = vadd.f32 %v3016, %v3176
        %v3178 = vpop.f32.mrf.mxu0
        %v3179 = vpop.f32.mrf.mxu0
        %v3180 = vadd.f32 %v3019, %v3179
        %v3181 = vpop.f32.mrf.mxu0
        %3182 = vmatprep.mubr.bf16.mxu0 0
        %3183 = vmatmul.mubr.bf16.gmra.mxu0 %v2882
        %v3184 = vpop.f32.mrf.mxu0
        %v3185 = vadd.f32 %v3024, %v3184
        %v3186 = vpop.f32.mrf.mxu0
        %v3187 = vpop.f32.mrf.mxu0
        %v3188 = vadd.f32 %v3027, %v3187
        %v3189 = vpop.f32.mrf.mxu0
        %3190 = vmatprep.mubr.bf16.mxu0 0
        %3191 = vmatmul.mubr.bf16.gmra.mxu0 %v2885
        %v3192 = vpop.f32.mrf.mxu0
        %v3193 = vadd.f32 %v3032, %v3192
        %v3194 = vpop.f32.mrf.mxu0
        %v3195 = vpop.f32.mrf.mxu0
        %v3196 = vadd.f32 %v3035, %v3195
        %v3197 = vpop.f32.mrf.mxu0
        %3198 = vmatprep.mubr.bf16.mxu0 0
        %3199 = vmatmul.mubr.bf16.gmra.mxu0 %v2888
        %v3200 = vpop.f32.mrf.mxu0
        %v3201 = vadd.f32 %v3040, %v3200
        %v3202 = vpop.f32.mrf.mxu0
        %v3203 = vpop.f32.mrf.mxu0
        %v3204 = vadd.f32 %v3043, %v3203
        %v3205 = vpop.f32.mrf.mxu0
        %3206 = vmatprep.mubr.bf16.mxu0 0
        %3207 = vmatmul.mubr.bf16.gmra.mxu0 %v2891
        %v3208 = vpop.f32.mrf.mxu0
        %v3209 = vadd.f32 %v3048, %v3208
        %v3210 = vpop.f32.mrf.mxu0
        %v3211 = vpop.f32.mrf.mxu0
        %v3212 = vadd.f32 %v3051, %v3211
        %v3213 = vpop.f32.mrf.mxu0
        %3214 = vdwg.mxu0
        %3215 = vst [vmem:[%s232] sm:$0xff] %v3089
        %3216 = vst [vmem:[%s232 + $0x8] sm:$0xff] %v3092
        %3217 = vst [vmem:[%s232 + $0x10] sm:$0xff] %v3097
        %3218 = vst [vmem:[%s232 + $0x18] sm:$0xff] %v3100
        %3219 = vst [vmem:[%s232 + $0x20] sm:$0xff] %v3105
        %3220 = vst [vmem:[%s232 + $0x28] sm:$0xff] %v3108
        %3221 = vst [vmem:[%s232 + $0x30] sm:$0xff] %v3113
        %3222 = vst [vmem:[%s232 + $0x38] sm:$0xff] %v3116
        %3223 = vst [vmem:[%s232 + $0x40] sm:$0xff] %v3121
        %3224 = vst [vmem:[%s232 + $0x48] sm:$0xff] %v3124
        %3225 = vst [vmem:[%s232 + $0x50] sm:$0xff] %v3129
        %3226 = vst [vmem:[%s232 + $0x58] sm:$0xff] %v3132
        %3227 = vst [vmem:[%s232 + $0x60] sm:$0xff] %v3137
        %3228 = vst [vmem:[%s232 + $0x68] sm:$0xff] %v3140
        %3229 = vst [vmem:[%s232 + $0x70] sm:$0xff] %v3145
        %3230 = vst [vmem:[%s232 + $0x78] sm:$0xff] %v3148
        %3231 = vst [vmem:[%s232 + $0x80] sm:$0xff] %v3153
        %3232 = vst [vmem:[%s232 + $0x88] sm:$0xff] %v3156
        %3233 = vst [vmem:[%s232 + $0x90] sm:$0xff] %v3161
        %3234 = vst [vmem:[%s232 + $0x98] sm:$0xff] %v3164
        %3235 = vst [vmem:[%s232 + $0xa0] sm:$0xff] %v3169
        %3236 = vst [vmem:[%s232 + $0xa8] sm:$0xff] %v3172
        %3237 = vst [vmem:[%s232 + $0xb0] sm:$0xff] %v3177
        %3238 = vst [vmem:[%s232 + $0xb8] sm:$0xff] %v3180
        %3239 = vst [vmem:[%s232 + $0xc0] sm:$0xff] %v3185
        %3240 = vst [vmem:[%s232 + $0xc8] sm:$0xff] %v3188
        %3241 = vst [vmem:[%s232 + $0xd0] sm:$0xff] %v3193
        %3242 = vst [vmem:[%s232 + $0xd8] sm:$0xff] %v3196
        %3243 = vst [vmem:[%s232 + $0xe0] sm:$0xff] %v3201
        %3244 = vst [vmem:[%s232 + $0xe8] sm:$0xff] %v3204
        %3245 = vst [vmem:[%s232 + $0xf0] sm:$0xff] %v3209
        %3246 = vst [vmem:[%s232 + $0xf8] sm:$0xff] %v3212
        %s3247 = sand.u32 %s142, 1
        %s3248 = scalar_lea.sflag [#allocation3], %s3247
        %s3249 = sand.u32 %s142, 1
        %s3250 = smul.addr %s3249, 256
        %s3251 = scalar_lea.vmem [#allocation2], %s3250
        // Predicated region
        $region41: #{_lambda_.1} parent=39 // pred_check
          %p3252 = pneg %p152
        $region42: #{_lambda_.1} parent=39 // pred_check_branch
          %3254 = sbr.rel (%p3252) target = $region44
        $region43: #{_lambda_.1} parent=39 // pred_region
          %s3256 = ssub.s32 4096, 4096
          %3257 = vsyncadd %s3248, %s3256
          %s3258 = smul.addr %s19, 32
          %s3259 = smul.addr %s3258, 128
          %s3260 = scalar_lea.hbm %s5, %s3259
          %s3261 = sshll.u32 %s3251, 4
          %s3262 = int_to_ptr.vmem [resolvable:$true] %s3261
          %3267 = dma.vmem_to_hbm [thread:$0]  %s3262, 4096, %s3260, %s3248, 128, 128, 8
        $region44: #{_lambda_.1} parent=39 // pred_fallthru
          _
      $region40: #{_lambda_.1} parent=5 // pred_fallthru
        _
      %p3268 = scmp.le.s32.totalorder 2, %s14
      // Predicated region
      $region45: #{_lambda_.1} parent=5 // pred_check
        %p3269 = pneg %p3268
      $region46: #{_lambda_.1} parent=5 // pred_check_branch
        %3271 = sbr.rel (%p3269) target = $region48
      $region47: #{_lambda_.1} parent=5 // pred_region
        %s3272 = ssub.s32 %s14, 2
        // Predicated region
        $region49: #{_lambda_.1} parent=47 // pred_check
          %p3273 = pneg %p158
        $region50: #{_lambda_.1} parent=47 // pred_check_branch
          %3275 = sbr.rel (%p3273) target = $region52
        $region51: #{_lambda_.1} parent=47 // pred_region
          %s3276 = sand.u32 %s143, 1
          %s3277 = scalar_lea.sflag [#allocation3], %s3276
          %s3278 = sand.u32 %s143, 1
          %s3279 = smul.addr %s3278, 256
          %s3280 = scalar_lea.vmem [#allocation2], %s3279
          %3281 = dma.done %s3277, 4096
        $region52: #{_lambda_.1} parent=47 // pred_fallthru
          _
      $region48: #{_lambda_.1} parent=5 // pred_fallthru
        _
    $region6: #{_lambda_.1} parent=1 // loop_footer
      %s18 = sadd.s32 1, %s14
    $region7: #{_lambda_.1} parent=1 // loop_footer_branch
      %13 = sbr.rel target = $region3
    $region8: #{_lambda_.1} parent=1 // loop_exit
      _
    %3282 = vsyncpa [#allocation3], 1
    %s3283 = scalar_lea.sflag [#allocation3], 1
    %3284 = vsyncpa %s3283, 1

</llo_original>
